<compile_context>
chip_gen: v7x
topology: tpu7x:2x2x1
jax: 0.10.0
libtpu: 0.0.40
codegen_flags: <defaults>
</compile_context>

<pallas_src>
import functools

import jax
import jax.numpy as jnp
from jax import lax
from jax.experimental import pallas as pl
from jax.experimental.pallas import tpu as pltpu


def combiner_kernel(x_ref, wblk_ref, bconv_ref, wlin_ref, blin_ref, out_ref,
                    *, bt, c_feat, h, w):
    # x_ref     : (bt*C_in, (h+2)*w)       rows-only zero-padded input, flattened, f32
    # wblk_ref  : (9, bt*C_feat, bt*C_in)  block-diagonal (over batch) 3x3 tap weights, f32
    # bconv_ref : (bt*C_feat, 1)           conv bias column (tiled over batch), f32
    # wlin_ref  : (HW, HW)                 Linear weight, pre-transposed (x @ wlin == Linear(x)), bf16
    # blin_ref  : (1, HW)                  Linear bias row, f32
    # out_ref   : (bt, HW)
    hw = h * w
    xflat = x_ref[...]                                        # (bt*C_in, (h+2)*w)

    # Column-in-row index of every lane of the flattened HW axis; used to zero the wrapped
    # element that pltpu.roll drags across row boundaries (conv padding=1 -> zeros there).
    col = lax.broadcasted_iota(jnp.int32, (1, hw), 1) % w
    left_edge = col == 0                                      # x == 0   -> column x-1 out of range
    right_edge = col == (w - 1)                               # x == w-1 -> column x+1 out of range

    # 3x3 conv (padding=1) with fused im2col: 9 shifted windows x block-diagonal tap matmuls.
    acc = jnp.zeros((bt * c_feat, hw), dtype=jnp.float32)
    for dy in range(3):
        # Row shift: static lane slice of the rows-padded, flattened input.
        rw = xflat[:, dy * w: dy * w + hw]                    # (bt*C_in, hw)
        # Column shifts: lane rotations (XLU) + edge masks (VPU selects).
        win_m1 = jnp.where(left_edge, 0.0, pltpu.roll(rw, shift=1, axis=1))        # column x-1
        win_p1 = jnp.where(right_edge, 0.0, pltpu.roll(rw, shift=hw - 1, axis=1))  # column x+1
        for dx, win in ((0, win_m1), (1, rw), (2, win_p1)):
            t = dy * 3 + dx
            acc = acc + jnp.dot(wblk_ref[t], win, preferred_element_type=jnp.float32)

    feat2d = jnp.maximum(acc + bconv_ref[...], 0.0)           # (bt*C_feat, hw), f32

    # weight_selector: Linear(HW, HW) over the last dim + sigmoid. One fat-M matmul for the
    # whole folded batch block (weights shared across batch). bf16 operands, f32 accumulation.
    logits = jnp.dot(feat2d.astype(wlin_ref.dtype), wlin_ref[...],
                     preferred_element_type=jnp.float32)      # (bt*C_feat, hw)
    weights = jax.nn.sigmoid(logits + blin_ref[...])          # f32 (EUP), v5e-safe

    # scores = features * weights ; reduce each group of C_feat sublanes (torch dim=1).
    scores = feat2d * weights
    out = scores.reshape(bt, c_feat, hw).sum(axis=1)          # (bt, hw)
    out_ref[...] = out.astype(out_ref.dtype)


def pick_batch_block(batch, c_feat, hw):
    """Fold batch into the Linear matmul's M dimension.

    Target ~128 rows per step (v5e MXU height; v6e/v7x are happy with 128/256) and only keep
    more than one grid step (so v7x's two TensorCores both get work) when each step still has
    non-trivial work; at tiny shapes the ~0.35us/step pipeline overhead dominates the compute.
    """
    target_rows = 128
    bt = min(batch, max(1, target_rows // max(c_feat, 1)))
    while batch % bt:                                         # round down to a divisor of batch
        bt -= 1
    if batch // bt > 1 and (bt * c_feat < 128 and hw < 1024):
        bt = batch                                            # splitting not worth it -> grid=(1,)
    return bt


def prepare_combiner_params(w_conv, b_conv, w_lin, b_lin, batch_block):
    """One-time (weight-load time) preprocessing; keeps transpose/cast off the per-call path."""
    c_feat, c_in, kh, kw = w_conv.shape
    assert (kh, kw) == (3, 3)
    bt = int(batch_block)
    hw = w_lin.shape[0]

    # (9, C_feat, C_in) per-tap weights (tap t = dy*3 + dx), made block-diagonal over the folded
    # batch -> one matmul per tap for the whole batch block, no in-kernel concat/relayout.
    w_taps = jnp.transpose(w_conv.astype(jnp.float32), (2, 3, 0, 1)).reshape(9, c_feat, c_in)
    eye = jnp.eye(bt, dtype=jnp.float32)
    w_blk = jnp.einsum("tij,ab->taibj", w_taps, eye).reshape(9, bt * c_feat, bt * c_in)
    # NOTE: for large bt the zero blocks waste MXU K; switch to per-batch VMEM-scratch writes there.

    bconv_col = jnp.tile(b_conv.astype(jnp.float32).reshape(c_feat, 1), (bt, 1))  # (bt*C_feat, 1)

    # Dominant operand carried in bf16 (dots keep f32 accumulation).
    # TODO(synk): on v7x, optionally carry wlin in fp8 (+per-row scale) and N-tile it over a
    # second ("arbitrary") grid axis once HW grows past ~2K so it fits the 64 MiB VMEM.
    wlin_t = w_lin.T.astype(jnp.bfloat16)                     # (HW, HW): x @ wlin_t == Linear(x)
    blin_row = b_lin.astype(jnp.float32).reshape(1, hw)

    return dict(bt=bt, c_feat=c_feat, c_in=c_in,
                w_blk=w_blk, bconv=bconv_col, wlin_t=wlin_t, blin=blin_row)


def combiner_forward(x, params):
    """x: (B, C_in, H, W) NCHW float32.  Returns (B, H*W) float32."""
    b, c_in, h, w = x.shape
    hw = h * w
    hpw = (h + 2) * w
    bt = params["bt"]
    c_feat = params["c_feat"]
    assert params["c_in"] == c_in
    assert b % bt == 0, "batch must be divisible by the batch block"

    # Rows-only zero pad + contiguous flatten (~1.1x input bytes) instead of a host im2col
    # (9x HBM amplification + extra XLA op). The 3x3 windows are built inside the kernel.
    x_pad = jnp.pad(x.astype(jnp.float32), ((0, 0), (0, 0), (1, 1), (0, 0)))
    x_flat = x_pad.reshape(b * c_in, hpw)

    kernel = functools.partial(combiner_kernel, bt=bt, c_feat=c_feat, h=h, w=w)
    invariant = dict(pipeline_mode=pl.Buffered(1))            # grid-invariant -> single-buffer

    return pl.pallas_call(
        kernel,
        out_shape=jax.ShapeDtypeStruct((b, hw), jnp.float32),
        grid_spec=pltpu.PrefetchScalarGridSpec(
            num_scalar_prefetch=0,
            grid=(b // bt,),
            in_specs=[
                pl.BlockSpec((bt * c_in, hpw), lambda i: (i, 0)),
                pl.BlockSpec((9, bt * c_feat, bt * c_in), lambda i: (0, 0, 0), **invariant),
                pl.BlockSpec((bt * c_feat, 1), lambda i: (0, 0), **invariant),
                # NOTE: at larger HW, tile this (HW, tn) over a second ("arbitrary") grid axis
                # (tn a multiple of 128) so the resident block stays a few MiB — mandatory on
                # v7x's 64 MiB VMEM once HW ~ 2K+.
                pl.BlockSpec((hw, hw), lambda i: (0, 0), **invariant),
                pl.BlockSpec((1, hw), lambda i: (0, 0), **invariant),
            ],
            out_specs=pl.BlockSpec((bt, hw), lambda i: (i, 0)),
        ),
        compiler_params=pltpu.CompilerParams(
            dimension_semantics=("parallel",),
            # 32 MiB is ample here; at larger HW raise it on v5e/v6e (128 MiB physical) and
            # keep it ~48-56 MiB on v7x (64 MiB physical).
            vmem_limit_bytes=32 * 1024 * 1024,
        ),
    )(x_flat, params["w_blk"], params["bconv"], params["wlin_t"], params["blin"])


def combiner_reference(x, w_conv, b_conv, w_lin, b_lin):
    """Pure-JAX f32 reference mirroring the PyTorch forward."""
    bsz, c_in, h, w = x.shape
    c_feat = w_conv.shape[0]
    xp = jnp.pad(x, ((0, 0), (0, 0), (1, 1), (1, 1)))
    feat = jnp.zeros((bsz, c_feat, h, w), jnp.float32)
    for dy in range(3):
        for dx in range(3):
            win = xp[:, :, dy:dy + h, dx:dx + w]
            feat = feat + jnp.einsum("oc,bcyx->boyx", w_conv[:, :, dy, dx], win)
    feat = jnp.maximum(feat + b_conv[None, :, None, None], 0.0).reshape(bsz, c_feat, h * w)
    weights = jax.nn.sigmoid(jnp.einsum("bch,jh->bcj", feat, w_lin) + b_lin)
    return jnp.sum(feat * weights, axis=1)                    # (B, HW)


if __name__ == "__main__":
    B, C_in, H, W = 2, 4, 16, 16
    C_feat = 8
    HW = H * W

    key = jax.random.PRNGKey(0)
    k1, k2, k3, k4, k5 = jax.random.split(key, 5)
    x = jax.random.normal(k1, (B, C_in, H, W), dtype=jnp.float32)
    w_conv = jax.random.normal(k2, (C_feat, C_in, 3, 3), dtype=jnp.float32) * 0.1
    b_conv = jax.random.normal(k3, (C_feat,), dtype=jnp.float32) * 0.1
    w_lin = jax.random.normal(k4, (HW, HW), dtype=jnp.float32) * 0.05
    b_lin = jax.random.normal(k5, (HW,), dtype=jnp.float32) * 0.05

    # Weight preprocessing happens once, off the per-call path.
    bt = pick_batch_block(B, C_feat, HW)          # -> bt = B = 2, grid = (1,) at these shapes
    params = prepare_combiner_params(w_conv, b_conv, w_lin, b_lin, bt)

    out = combiner_forward(x, params)
    out = jax.block_until_ready(out)

    ref = combiner_reference(x, w_conv, b_conv, w_lin, b_lin)
    assert out.shape == (B, HW)
    # Tolerance widened slightly because the Linear matmul runs with bf16 operands
    # (accumulation stays f32).
    assert jnp.allclose(out, ref, atol=2e-2, rtol=2e-2), "mismatch vs reference"
    print("KERNEL_OK")
</pallas_src>

<mosaic_0001>
module attributes {stable_mosaic.version = 11 : i64} {
  func.func @combiner_kernel(%arg0: i32, %arg1: memref<8x288xf32, #tpu.memory_space<vmem>>, %arg2: memref<9x16x8xf32, #tpu.memory_space<vmem>>, %arg3: memref<16x1xf32, #tpu.memory_space<vmem>>, %arg4: memref<256x256xbf16, #tpu.memory_space<vmem>>, %arg5: memref<1x256xf32, #tpu.memory_space<vmem>>, %arg6: memref<2x256xf32, #tpu.memory_space<vmem>>) attributes {dimension_semantics = [#tpu.dimension_semantics<parallel>], iteration_bounds = array<i64: 1>, scalar_prefetch = 0 : i64, scratch_operands = 0 : i64, tpu.core_type = #tpu.core_type<tc>, window_params = [{transform_indices = @transform_0, window_bounds = array<i64: 8, 288>}, {pipeline_mode = #tpu.pipeline_mode<synchronous>, transform_indices = @transform_1, window_bounds = array<i64: 9, 16, 8>}, {pipeline_mode = #tpu.pipeline_mode<synchronous>, transform_indices = @transform_2, window_bounds = array<i64: 16, 1>}, {pipeline_mode = #tpu.pipeline_mode<synchronous>, transform_indices = @transform_3, window_bounds = array<i64: 256, 256>}, {pipeline_mode = #tpu.pipeline_mode<synchronous>, transform_indices = @transform_4, window_bounds = array<i64: 1, 256>}, {transform_indices = @transform_5, window_bounds = array<i64: 2, 256>}]} {
    %c0 = arith.constant 0 : index
    %c0_0 = arith.constant 0 : index
    %0 = vector.load %arg1[%c0, %c0_0] : memref<8x288xf32, #tpu.memory_space<vmem>>, vector<8x288xf32>
    %1 = tpu.iota {dimensions = array<i32: 1>} : vector<1x256xi32>
    %c16_i32 = arith.constant 16 : i32
    %c0_i32 = arith.constant 0 : i32
    %2 = arith.cmpi eq, %c16_i32, %c0_i32 : i32
    %c1_i32 = arith.constant 1 : i32
    %3 = arith.select %2, %c1_i32, %c16_i32 : i32
    %4 = vector.broadcast %3 : i32 to vector<1x256xi32>
    %5 = arith.remsi %1, %4 : vector<1x256xi32>
    %c0_i32_1 = arith.constant 0 : i32
    %6 = vector.broadcast %c0_i32_1 : i32 to vector<1x256xi32>
    %7 = arith.cmpi ne, %5, %6 : vector<1x256xi32>
    %c0_i32_2 = arith.constant 0 : i32
    %8 = vector.broadcast %c0_i32_2 : i32 to vector<1x256xi32>
    %9 = arith.cmpi slt, %5, %8 : vector<1x256xi32>
    %c0_i32_3 = arith.constant 0 : i32
    %10 = arith.cmpi slt, %3, %c0_i32_3 : i32
    %11 = vector.broadcast %10 : i1 to vector<1x256xi1>
    %12 = vector.broadcast %11 : vector<1x256xi1> to vector<1x256xi1>
    %13 = arith.xori %9, %12 : vector<1x256xi1>
    %14 = arith.andi %13, %7 : vector<1x256xi1>
    %15 = vector.broadcast %3 : i32 to vector<1x256xi32>
    %16 = arith.addi %5, %15 : vector<1x256xi32>
    %17 = arith.select %14, %16, %5 : vector<1x256xi1>, vector<1x256xi32>
    %c0_i32_4 = arith.constant 0 : i32
    %18 = vector.broadcast %c0_i32_4 : i32 to vector<1x256xi32>
    %19 = arith.cmpi eq, %17, %18 : vector<1x256xi32>
    %c15_i32 = arith.constant 15 : i32
    %20 = vector.broadcast %c15_i32 : i32 to vector<1x256xi32>
    %21 = arith.cmpi eq, %17, %20 : vector<1x256xi32>
    %cst = arith.constant 0.000000e+00 : f32
    %22 = vector.broadcast %cst : f32 to vector<16x256xf32>
    %23 = vector.extract_strided_slice %0 {offsets = [0, 0], sizes = [8, 256], strides = [1, 1]} : vector<8x288xf32> to vector<8x256xf32>
    %c1_i32_5 = arith.constant 1 : i32
    %24 = tpu.dynamic_rotate %23 by %c1_i32_5 dim 1 : vector<8x256xf32>, i32 -> vector<8x256xf32>
    %cst_6 = arith.constant 0.000000e+00 : f32
    %25 = vector.shape_cast %19 : vector<1x256xi1> to vector<1x256xi1>
    %26 = vector.broadcast %25 : vector<1x256xi1> to vector<8x256xi1>
    %27 = vector.broadcast %cst_6 : f32 to vector<8x256xf32>
    %28 = arith.select %26, %27, %24 : vector<8x256xi1>, vector<8x256xf32>
    %c255_i32 = arith.constant 255 : i32
    %29 = tpu.dynamic_rotate %23 by %c255_i32 dim 1 : vector<8x256xf32>, i32 -> vector<8x256xf32>
    %cst_7 = arith.constant 0.000000e+00 : f32
    %30 = vector.shape_cast %21 : vector<1x256xi1> to vector<1x256xi1>
    %31 = vector.broadcast %30 : vector<1x256xi1> to vector<8x256xi1>
    %32 = vector.broadcast %cst_7 : f32 to vector<8x256xf32>
    %33 = arith.select %31, %32, %29 : vector<8x256xi1>, vector<8x256xf32>
    %c0_8 = arith.constant 0 : index
    %c0_9 = arith.constant 0 : index
    %c0_10 = arith.constant 0 : index
    %34 = vector.load %arg2[%c0_8, %c0_9, %c0_10] : memref<9x16x8xf32, #tpu.memory_space<vmem>>, vector<1x16x8xf32>
    %35 = vector.shape_cast %34 : vector<1x16x8xf32> to vector<16x8xf32>
    %cst_11 = arith.constant dense<0.000000e+00> : vector<16x256xf32>
    %36 = tpu.matmul %35, %28, %cst_11 {dimension_numbers = #tpu.dot_dimension_numbers<[1], [0], [0], [1], [0, 0, 1, 1], [], []>} : vector<16x8xf32>, vector<8x256xf32>, vector<16x256xf32> -> vector<16x256xf32>
    %37 = arith.addf %22, %36 : vector<16x256xf32>
    %c1 = arith.constant 1 : index
    %c0_12 = arith.constant 0 : index
    %c0_13 = arith.constant 0 : index
    %38 = vector.load %arg2[%c1, %c0_12, %c0_13] : memref<9x16x8xf32, #tpu.memory_space<vmem>>, vector<1x16x8xf32>
    %39 = vector.shape_cast %38 : vector<1x16x8xf32> to vector<16x8xf32>
    %cst_14 = arith.constant dense<0.000000e+00> : vector<16x256xf32>
    %40 = tpu.matmul %39, %23, %cst_14 {dimension_numbers = #tpu.dot_dimension_numbers<[1], [0], [0], [1], [0, 0, 1, 1], [], []>} : vector<16x8xf32>, vector<8x256xf32>, vector<16x256xf32> -> vector<16x256xf32>
    %41 = arith.addf %37, %40 : vector<16x256xf32>
    %c2 = arith.constant 2 : index
    %c0_15 = arith.constant 0 : index
    %c0_16 = arith.constant 0 : index
    %42 = vector.load %arg2[%c2, %c0_15, %c0_16] : memref<9x16x8xf32, #tpu.memory_space<vmem>>, vector<1x16x8xf32>
    %43 = vector.shape_cast %42 : vector<1x16x8xf32> to vector<16x8xf32>
    %cst_17 = arith.constant dense<0.000000e+00> : vector<16x256xf32>
    %44 = tpu.matmul %43, %33, %cst_17 {dimension_numbers = #tpu.dot_dimension_numbers<[1], [0], [0], [1], [0, 0, 1, 1], [], []>} : vector<16x8xf32>, vector<8x256xf32>, vector<16x256xf32> -> vector<16x256xf32>
    %45 = arith.addf %41, %44 : vector<16x256xf32>
    %46 = vector.extract_strided_slice %0 {offsets = [0, 16], sizes = [8, 256], strides = [1, 1]} : vector<8x288xf32> to vector<8x256xf32>
    %c1_i32_18 = arith.constant 1 : i32
    %47 = tpu.dynamic_rotate %46 by %c1_i32_18 dim 1 : vector<8x256xf32>, i32 -> vector<8x256xf32>
    %cst_19 = arith.constant 0.000000e+00 : f32
    %48 = vector.shape_cast %19 : vector<1x256xi1> to vector<1x256xi1>
    %49 = vector.broadcast %48 : vector<1x256xi1> to vector<8x256xi1>
    %50 = vector.broadcast %cst_19 : f32 to vector<8x256xf32>
    %51 = arith.select %49, %50, %47 : vector<8x256xi1>, vector<8x256xf32>
    %c255_i32_20 = arith.constant 255 : i32
    %52 = tpu.dynamic_rotate %46 by %c255_i32_20 dim 1 : vector<8x256xf32>, i32 -> vector<8x256xf32>
    %cst_21 = arith.constant 0.000000e+00 : f32
    %53 = vector.shape_cast %21 : vector<1x256xi1> to vector<1x256xi1>
    %54 = vector.broadcast %53 : vector<1x256xi1> to vector<8x256xi1>
    %55 = vector.broadcast %cst_21 : f32 to vector<8x256xf32>
    %56 = arith.select %54, %55, %52 : vector<8x256xi1>, vector<8x256xf32>
    %c3 = arith.constant 3 : index
    %c0_22 = arith.constant 0 : index
    %c0_23 = arith.constant 0 : index
    %57 = vector.load %arg2[%c3, %c0_22, %c0_23] : memref<9x16x8xf32, #tpu.memory_space<vmem>>, vector<1x16x8xf32>
    %58 = vector.shape_cast %57 : vector<1x16x8xf32> to vector<16x8xf32>
    %cst_24 = arith.constant dense<0.000000e+00> : vector<16x256xf32>
    %59 = tpu.matmul %58, %51, %cst_24 {dimension_numbers = #tpu.dot_dimension_numbers<[1], [0], [0], [1], [0, 0, 1, 1], [], []>} : vector<16x8xf32>, vector<8x256xf32>, vector<16x256xf32> -> vector<16x256xf32>
    %60 = arith.addf %45, %59 : vector<16x256xf32>
    %c4 = arith.constant 4 : index
    %c0_25 = arith.constant 0 : index
    %c0_26 = arith.constant 0 : index
    %61 = vector.load %arg2[%c4, %c0_25, %c0_26] : memref<9x16x8xf32, #tpu.memory_space<vmem>>, vector<1x16x8xf32>
    %62 = vector.shape_cast %61 : vector<1x16x8xf32> to vector<16x8xf32>
    %cst_27 = arith.constant dense<0.000000e+00> : vector<16x256xf32>
    %63 = tpu.matmul %62, %46, %cst_27 {dimension_numbers = #tpu.dot_dimension_numbers<[1], [0], [0], [1], [0, 0, 1, 1], [], []>} : vector<16x8xf32>, vector<8x256xf32>, vector<16x256xf32> -> vector<16x256xf32>
    %64 = arith.addf %60, %63 : vector<16x256xf32>
    %c5 = arith.constant 5 : index
    %c0_28 = arith.constant 0 : index
    %c0_29 = arith.constant 0 : index
    %65 = vector.load %arg2[%c5, %c0_28, %c0_29] : memref<9x16x8xf32, #tpu.memory_space<vmem>>, vector<1x16x8xf32>
    %66 = vector.shape_cast %65 : vector<1x16x8xf32> to vector<16x8xf32>
    %cst_30 = arith.constant dense<0.000000e+00> : vector<16x256xf32>
    %67 = tpu.matmul %66, %56, %cst_30 {dimension_numbers = #tpu.dot_dimension_numbers<[1], [0], [0], [1], [0, 0, 1, 1], [], []>} : vector<16x8xf32>, vector<8x256xf32>, vector<16x256xf32> -> vector<16x256xf32>
    %68 = arith.addf %64, %67 : vector<16x256xf32>
    %69 = vector.extract_strided_slice %0 {offsets = [0, 32], sizes = [8, 256], strides = [1, 1]} : vector<8x288xf32> to vector<8x256xf32>
    %c1_i32_31 = arith.constant 1 : i32
    %70 = tpu.dynamic_rotate %69 by %c1_i32_31 dim 1 : vector<8x256xf32>, i32 -> vector<8x256xf32>
    %cst_32 = arith.constant 0.000000e+00 : f32
    %71 = vector.shape_cast %19 : vector<1x256xi1> to vector<1x256xi1>
    %72 = vector.broadcast %71 : vector<1x256xi1> to vector<8x256xi1>
    %73 = vector.broadcast %cst_32 : f32 to vector<8x256xf32>
    %74 = arith.select %72, %73, %70 : vector<8x256xi1>, vector<8x256xf32>
    %c255_i32_33 = arith.constant 255 : i32
    %75 = tpu.dynamic_rotate %69 by %c255_i32_33 dim 1 : vector<8x256xf32>, i32 -> vector<8x256xf32>
    %cst_34 = arith.constant 0.000000e+00 : f32
    %76 = vector.shape_cast %21 : vector<1x256xi1> to vector<1x256xi1>
    %77 = vector.broadcast %76 : vector<1x256xi1> to vector<8x256xi1>
    %78 = vector.broadcast %cst_34 : f32 to vector<8x256xf32>
    %79 = arith.select %77, %78, %75 : vector<8x256xi1>, vector<8x256xf32>
    %c6 = arith.constant 6 : index
    %c0_35 = arith.constant 0 : index
    %c0_36 = arith.constant 0 : index
    %80 = vector.load %arg2[%c6, %c0_35, %c0_36] : memref<9x16x8xf32, #tpu.memory_space<vmem>>, vector<1x16x8xf32>
    %81 = vector.shape_cast %80 : vector<1x16x8xf32> to vector<16x8xf32>
    %cst_37 = arith.constant dense<0.000000e+00> : vector<16x256xf32>
    %82 = tpu.matmul %81, %74, %cst_37 {dimension_numbers = #tpu.dot_dimension_numbers<[1], [0], [0], [1], [0, 0, 1, 1], [], []>} : vector<16x8xf32>, vector<8x256xf32>, vector<16x256xf32> -> vector<16x256xf32>
    %83 = arith.addf %68, %82 : vector<16x256xf32>
    %c7 = arith.constant 7 : index
    %c0_38 = arith.constant 0 : index
    %c0_39 = arith.constant 0 : index
    %84 = vector.load %arg2[%c7, %c0_38, %c0_39] : memref<9x16x8xf32, #tpu.memory_space<vmem>>, vector<1x16x8xf32>
    %85 = vector.shape_cast %84 : vector<1x16x8xf32> to vector<16x8xf32>
    %cst_40 = arith.constant dense<0.000000e+00> : vector<16x256xf32>
    %86 = tpu.matmul %85, %69, %cst_40 {dimension_numbers = #tpu.dot_dimension_numbers<[1], [0], [0], [1], [0, 0, 1, 1], [], []>} : vector<16x8xf32>, vector<8x256xf32>, vector<16x256xf32> -> vector<16x256xf32>
    %87 = arith.addf %83, %86 : vector<16x256xf32>
    %c8 = arith.constant 8 : index
    %c0_41 = arith.constant 0 : index
    %c0_42 = arith.constant 0 : index
    %88 = vector.load %arg2[%c8, %c0_41, %c0_42] : memref<9x16x8xf32, #tpu.memory_space<vmem>>, vector<1x16x8xf32>
    %89 = vector.shape_cast %88 : vector<1x16x8xf32> to vector<16x8xf32>
    %cst_43 = arith.constant dense<0.000000e+00> : vector<16x256xf32>
    %90 = tpu.matmul %89, %79, %cst_43 {dimension_numbers = #tpu.dot_dimension_numbers<[1], [0], [0], [1], [0, 0, 1, 1], [], []>} : vector<16x8xf32>, vector<8x256xf32>, vector<16x256xf32> -> vector<16x256xf32>
    %91 = arith.addf %87, %90 : vector<16x256xf32>
    %c0_44 = arith.constant 0 : index
    %c0_45 = arith.constant 0 : index
    %92 = vector.load %arg3[%c0_44, %c0_45] : memref<16x1xf32, #tpu.memory_space<vmem>>, vector<16x1xf32>
    %93 = vector.broadcast %92 : vector<16x1xf32> to vector<16x256xf32>
    %94 = arith.addf %91, %93 : vector<16x256xf32>
    %cst_46 = arith.constant 0.000000e+00 : f32
    %95 = vector.broadcast %cst_46 : f32 to vector<16x256xf32>
    %96 = arith.maximumf %94, %95 : vector<16x256xf32>
    %97 = arith.truncf %96 : vector<16x256xf32> to vector<16x256xbf16>
    %c0_47 = arith.constant 0 : index
    %c0_48 = arith.constant 0 : index
    %98 = vector.load %arg4[%c0_47, %c0_48] : memref<256x256xbf16, #tpu.memory_space<vmem>>, vector<256x256xbf16>
    %cst_49 = arith.constant dense<0.000000e+00> : vector<16x256xf32>
    %99 = tpu.matmul %97, %98, %cst_49 {dimension_numbers = #tpu.dot_dimension_numbers<[1], [0], [0], [1], [0, 0, 1, 1], [], []>} : vector<16x256xbf16>, vector<256x256xbf16>, vector<16x256xf32> -> vector<16x256xf32>
    %c0_50 = arith.constant 0 : index
    %c0_51 = arith.constant 0 : index
    %100 = vector.load %arg5[%c0_50, %c0_51] : memref<1x256xf32, #tpu.memory_space<vmem>>, vector<1x256xf32>
    %101 = vector.broadcast %100 : vector<1x256xf32> to vector<16x256xf32>
    %102 = arith.addf %99, %101 : vector<16x256xf32>
    %103 = arith.negf %102 : vector<16x256xf32>
    %104 = math.exp %103 : vector<16x256xf32>
    %cst_52 = arith.constant 1.000000e+00 : f32
    %105 = vector.broadcast %cst_52 : f32 to vector<16x256xf32>
    %106 = arith.addf %105, %104 : vector<16x256xf32>
    %107 = arith.divf %105, %106 : vector<16x256xf32>
    %108 = arith.mulf %96, %107 : vector<16x256xf32>
    %109 = vector.shape_cast %108 : vector<16x256xf32> to vector<2x8x256xf32>
    %cst_53 = arith.constant dense<0.000000e+00> : vector<2x256xf32>
    %110 = vector.multi_reduction <add>, %109, %cst_53 [1] : vector<2x8x256xf32> to vector<2x256xf32>
    %c0_54 = arith.constant 0 : index
    %c0_55 = arith.constant 0 : index
    %111 = vector.load %arg6[%c0_54, %c0_55] : memref<2x256xf32, #tpu.memory_space<vmem>>, vector<2x256xf32>
    tpu.vector_store %arg6[%c0_54, %c0_55], %110 {strides = array<i32>} : memref<2x256xf32, #tpu.memory_space<vmem>>, vector<2x256xf32>,
    return
  }
  func.func @transform_0(%arg0: i32) -> (i32, i32) {
    %c0_i32 = arith.constant 0 : i32
    %c0_i32_0 = arith.constant 0 : i32
    return %arg0, %c0_i32 : i32, i32
  }
  func.func @transform_1(%arg0: i32) -> (i32, i32, i32) {
    %c0_i32 = arith.constant 0 : i32
    %c0_i32_0 = arith.constant 0 : i32
    %c0_i32_1 = arith.constant 0 : i32
    %c0_i32_2 = arith.constant 0 : i32
    return %c0_i32, %c0_i32_0, %c0_i32_1 : i32, i32, i32
  }
  func.func @transform_2(%arg0: i32) -> (i32, i32) {
    %c0_i32 = arith.constant 0 : i32
    %c0_i32_0 = arith.constant 0 : i32
    %c0_i32_1 = arith.constant 0 : i32
    return %c0_i32, %c0_i32_0 : i32, i32
  }
  func.func @transform_3(%arg0: i32) -> (i32, i32) {
    %c0_i32 = arith.constant 0 : i32
    %c0_i32_0 = arith.constant 0 : i32
    %c0_i32_1 = arith.constant 0 : i32
    return %c0_i32, %c0_i32_0 : i32, i32
  }
  func.func @transform_4(%arg0: i32) -> (i32, i32) {
    %c0_i32 = arith.constant 0 : i32
    %c0_i32_0 = arith.constant 0 : i32
    %c0_i32_1 = arith.constant 0 : i32
    return %c0_i32, %c0_i32_0 : i32, i32
  }
  func.func @transform_5(%arg0: i32) -> (i32, i32) {
    %c0_i32 = arith.constant 0 : i32
    %c0_i32_0 = arith.constant 0 : i32
    return %arg0, %c0_i32 : i32, i32
  }
}

</mosaic_0001>

<llo_original>
// kernel: tpu_custom_call.1
$region0: #{tpu_custom_call.1}
  #allocation0 [shape = 'u32[]', space=smem, size = 0x4, offset = 0x4, fixed_abs, tag = 'smem constant byte address 0x4 - core index']
  #allocation1 [shape = 'u32[144,128]{1,0:T(1,128)}', space=vmem, size = 0x12000, scoped, tag = 'internal scratch']
  %s0 = inlined_call_operand.vmem [shape: f32[8,288], index: 0, kind: input, shape index: {}]
  %s1 = inlined_call_operand.vmem [shape: f32[9,16,8], index: 1, kind: input, shape index: {}]
  %s2 = inlined_call_operand.vmem [shape: f32[16,1], index: 2, kind: input, shape index: {}]
  %s3 = inlined_call_operand.hbm [shape: bf16[256,256], index: 3, kind: input, shape index: {}]
  %s4 = inlined_call_operand.vmem [shape: f32[1,256], index: 4, kind: input, shape index: {}]
  %s5 = inlined_call_operand.hbm [shape: f32[2,256], index: 5, kind: output, shape index: {}]
  %s6 = sld [smem:[#allocation0]]
  $region34: #{tpu_custom_call.1} parent=0
    _
  %s8 = ssub.s32 1, %s6
  %s9 = scalar_select 0, %s8, %s6
  $region1: #{tpu_custom_call.1} parent=0
    #allocation2 [shape = 'u8[131072]{0}', space=vmem, size = 0x20000, scoped, tag = 'input window, operand 3, single buffered']
    #allocation3 [shape = 's32[1]{0}', space=sflag, size = 0x4, scoped, tag = 'scoped memory for tpu_custom_call.1']
    #allocation4 [shape = 's32[1]{0}', space=sflag, size = 0x4, scoped, tag = 'scoped memory for tpu_custom_call.1']
    #allocation5 [shape = 'u8[2048]{0}', space=vmem, size = 0x800, scoped, tag = 'output window, operand 0, single buffered']
    %10 = vsyncpa [#allocation3], 0
    %11 = vsyncpa [#allocation4], 0
    // Predicated region
    $region2: #{tpu_custom_call.1} parent=1 // pred_check
      _
    $region3: #{tpu_custom_call.1} parent=1 // pred_check_branch
      %13 = sbr.rel (0) target = $region5
    $region4: #{tpu_custom_call.1} parent=1 // pred_region
      _
    $region5: #{tpu_custom_call.1} parent=1 // pred_fallthru
      _
    // Predicated region
    $region6: #{tpu_custom_call.1} parent=1 // pred_check
      _
    $region7: #{tpu_custom_call.1} parent=1 // pred_check_branch
      %15 = sbr.rel (0) target = $region9
    $region8: #{tpu_custom_call.1} parent=1 // pred_region
      _
    $region9: #{tpu_custom_call.1} parent=1 // pred_fallthru
      _
    // Predicated region
    $region10: #{tpu_custom_call.1} parent=1 // pred_check
      _
    $region11: #{tpu_custom_call.1} parent=1 // pred_check_branch
      %17 = sbr.rel (0) target = $region13
    $region12: #{tpu_custom_call.1} parent=1 // pred_region
      _
    $region13: #{tpu_custom_call.1} parent=1 // pred_fallthru
      _
    // Predicated region
    $region14: #{tpu_custom_call.1} parent=1 // pred_check
      _
    $region15: #{tpu_custom_call.1} parent=1 // pred_check_branch
      %19 = sbr.rel (0) target = $region17
    $region16: #{tpu_custom_call.1} parent=1 // pred_region
      %s21 = ssub.s32 4096, 4096
      %22 = vsyncadd [#allocation3], %s21
      %s23 = sshll.u32 [#allocation2], 4
      %s24 = int_to_ptr.vmem [resolvable:$true] %s23
      %29 = dma.hbm_to_vmem [thread:$0]  %s3, 4096, %s24, [#allocation3], 128, 128, 8
    $region17: #{tpu_custom_call.1} parent=1 // pred_fallthru
      _
    // Predicated region
    $region18: #{tpu_custom_call.1} parent=1 // pred_check
      _
    $region19: #{tpu_custom_call.1} parent=1 // pred_check_branch
      %31 = sbr.rel (0) target = $region21
    $region20: #{tpu_custom_call.1} parent=1 // pred_region
      _
    $region21: #{tpu_custom_call.1} parent=1 // pred_fallthru
      _
    // Predicated region
    $region22: #{tpu_custom_call.1} parent=1 // pred_check
      _
    $region23: #{tpu_custom_call.1} parent=1 // pred_check_branch
      %33 = sbr.rel (0) target = $region25
    $region24: #{tpu_custom_call.1} parent=1 // pred_region
      %34 = dma.done [#allocation3], 4096
    $region25: #{tpu_custom_call.1} parent=1 // pred_fallthru
      _
    %v35 = vld [vmem:[%s0] sm:$0xff]
    %v36 = vld [vmem:[%s0 + $0x8] sm:$0xff]
    %v37 = vld [vmem:[%s0 + $0x10] sm:$0xff]
    %v38 = vlaneseq
    %v39 = vand.u32 %v38, 127
    %v40 = vadd.s32 %v39, 128
    %vm41 = vcmp.lt.s32.totalorder %v39, 0
    %v42 = vsub.s32 0, %v39
    %v43 = vsel %vm41, %v42, %v39
    %v44 = vshrl.u32 %v43, 4
    %v45 = vand.u32 %v43, 15
    %v46 = vsub.s32 0, %v45
    %v47 = vsel %vm41, %v46, %v45
    %vm48 = vcmp.lt.s32.totalorder %v40, 0
    %v49 = vsub.s32 0, %v40
    %v50 = vsel %vm48, %v49, %v40
    %v51 = vshrl.u32 %v50, 4
    %v52 = vand.u32 %v50, 15
    %v53 = vsub.s32 0, %v52
    %v54 = vsel %vm48, %v53, %v52
    %vm55 = vcmp.ne.s32.totalorder %v47, 0
    %vm56 = vcmp.ne.s32.totalorder %v54, 0
    %vm57 = vcmp.lt.s32.totalorder %v47, 0
    %vm58 = vcmp.lt.s32.totalorder %v54, 0
    %vm59 = vmand %vm57, %vm55
    %vm60 = vmand %vm58, %vm56
    %v61 = vadd.s32 %v47, 16
    %v62 = vadd.s32 %v54, 16
    %v63 = vsel %vm59, %v61, %v47
    %v64 = vsel %vm60, %v62, %v54
    %vm65 = vcmp.eq.s32.totalorder %v63, 0
    %vm66 = vcmp.eq.s32.totalorder %v64, 0
    %vm67 = vcmp.eq.s32.totalorder %v63, 15
    %vm68 = vcmp.eq.s32.totalorder %v64, 15
    %69 = vrot.lane.b32.xlu0 %v35, 1
    %v70 = vpop.permute.xlu0 %69
    %71 = vrot.lane.b32.xlu0 %v36, 1
    %v72 = vpop.permute.xlu0 %71
    %vm73 = vcmp.lt.s32.totalorder %v39, 1
    %v74 = vsel %vm73, %v70, %v72
    %v75 = vsel %vm73, %v72, %v70
    %v76 = vsel %vm65, 1, 0
    %v77 = vsel %vm66, 1, 0
    %vm78 = vcmp.eq.s32.totalorder %v76, 1
    %vm79 = vcmp.eq.s32.totalorder %v77, 1
    %v80 = vsel %vm78, 0.0, %v75
    %v81 = vsel %vm79, 0.0, %v74
    %82 = vrot.lane.b32.xlu0 %v35, 127
    %v83 = vpop.permute.xlu0 %82
    %84 = vrot.lane.b32.xlu0 %v36, 127
    %v85 = vpop.permute.xlu0 %84
    %vm86 = vcmp.lt.s32.totalorder %v39, 127
    %v87 = vsel %vm86, %v83, %v85
    %v88 = vsel %vm86, %v85, %v83
    %v89 = vsel %vm67, 1, 0
    %v90 = vsel %vm68, 1, 0
    %vm91 = vcmp.eq.s32.totalorder %v89, 1
    %vm92 = vcmp.eq.s32.totalorder %v90, 1
    %v93 = vsel %vm91, 0.0, %v87
    %v94 = vsel %vm92, 0.0, %v88
    %v95 = vld [vmem:[%s1] sm:$0xff]
    %v96 = vld [vmem:[%s1 + $0x8] sm:$0xff]
    %s97 = scalar_lea.vmem %s1, 16
    %v98 = vld [vmem:[%s97] sm:$0xff]
    %v99 = vld [vmem:[%s97 + $0x8] sm:$0xff]
    %vm100 = vcmask 64512
    %v102 = vsel %vm100, %v98, 0
    %v105 = vsel %vm100, %v99, 0
    %107 = vmatprep.subr.mxu0 %v36
    %108 = vmatpush1.msra.mxu0 %v35
    %109 = vmatprep.subr.mxu0 0.0
    %110 = vmatpush1.msra.mxu0 0.0
    %111 = vmatprep.subr.mxu0 0.0
    %112 = vmatpush1.msra.mxu0 0.0
    %113 = vmatprep.subr.mxu0 0.0
    %114 = vmatpush1.msra.mxu0 0.0
    %115 = vmatprep.subr.mxu0 0.0
    %116 = vmatpush1.msra.mxu0 0.0
    %117 = vmatprep.subr.mxu0 0.0
    %118 = vmatpush1.msra.mxu0 0.0
    %119 = vmatprep.subr.mxu0 0.0
    %120 = vmatpush1.msra.mxu0 0.0
    %121 = vmatprep.subr.mxu0 0.0
    %122 = vmatpush1.msra.mxu0 0.0
    %123 = vmatprep.subr.mxu0 0.0
    %124 = vmatpush1.msra.mxu0 0.0
    %125 = vmatprep.subr.mxu0 0.0
    %126 = vmatpush1.msra.mxu0 0.0
    %127 = vmatprep.subr.mxu0 0.0
    %128 = vmatpush1.msra.mxu0 0.0
    %129 = vmatprep.subr.mxu0 0.0
    %130 = vmatpush1.msra.mxu0 0.0
    %131 = vmatprep.subr.mxu0 0.0
    %132 = vmatpush1.msra.mxu0 0.0
    %133 = vmatprep.subr.mxu0 0.0
    %134 = vmatpush1.msra.mxu0 0.0
    %135 = vmatprep.subr.mxu0 0.0
    %136 = vmatpush1.msra.mxu0 0.0
    %137 = vmatprep.subr.mxu0 0.0
    %138 = vmatpush1.msra.mxu0 0.0
    %139 = vmatprep.subr.mxu0 0.0
    %140 = vmatpush1.msra.mxu0 0.0
    %141 = vmatprep.subr.mxu0 0.0
    %142 = vmatpush1.msra.mxu0 0.0
    %143 = vmatprep.subr.mxu0 0.0
    %144 = vmatpush1.msra.mxu0 0.0
    %145 = vmatprep.subr.mxu0 0.0
    %146 = vmatpush1.msra.mxu0 0.0
    %147 = vmatprep.subr.mxu0 0.0
    %148 = vmatpush1.msra.mxu0 0.0
    %149 = vmatprep.subr.mxu0 0.0
    %150 = vmatpush1.msra.mxu0 0.0
    %151 = vmatprep.subr.mxu0 0.0
    %152 = vmatpush1.msra.mxu0 0.0
    %153 = vmatprep.subr.mxu0 0.0
    %154 = vmatpush1.msra.mxu0 0.0
    %155 = vmatprep.subr.mxu0 0.0
    %156 = vmatpush1.msra.mxu0 0.0
    %157 = vmatprep.subr.mxu0 0.0
    %158 = vmatpush1.msra.mxu0 0.0
    %159 = vmatprep.subr.mxu0 0.0
    %160 = vmatpush1.msra.mxu0 0.0
    %161 = vmatprep.subr.mxu0 0.0
    %162 = vmatpush1.msra.mxu0 0.0
    %163 = vmatprep.subr.mxu0 0.0
    %164 = vmatpush1.msra.mxu0 0.0
    %165 = vmatprep.subr.mxu0 0.0
    %166 = vmatpush1.msra.mxu0 0.0
    %167 = vmatprep.subr.mxu0 0.0
    %168 = vmatpush1.msra.mxu0 0.0
    %169 = vmatprep.subr.mxu0 0.0
    %170 = vmatpush1.msra.mxu0 0.0
    %171 = vmatprep.mubr.f32.mxu0 0.0
    %172 = vmatmul.mubr.f32.gmra.mrb[0].mxu0 %v102
    %v173 = vpop.f32.mrb[0].mxu0
    %v174 = vadd.f32 0.0, %v173
    %v175 = vpop.f32.mrb[0].mxu0
    %v176 = vadd.f32 0.0, %v175
    %177 = vmatprep.mubr.f32.mxu0 0.0
    %178 = vmatmul.mubr.f32.gmra.mrb[0].mxu0 %v105
    %v179 = vpop.f32.mrb[0].mxu0
    %v180 = vadd.f32 0.0, %v179
    %v181 = vpop.f32.mrb[0].mxu0
    %v182 = vadd.f32 0.0, %v181
    %183 = vdwg.mxu0
    %v185 = vsel %vm100, %v95, 0
    %v188 = vsel %vm100, %v96, 0
    %190 = vmatprep.subr.mxu0 %v81
    %191 = vmatpush1.msra.mxu0 %v80
    %192 = vmatprep.subr.mxu0 0.0
    %193 = vmatpush1.msra.mxu0 0.0
    %194 = vmatprep.subr.mxu0 0.0
    %195 = vmatpush1.msra.mxu0 0.0
    %196 = vmatprep.subr.mxu0 0.0
    %197 = vmatpush1.msra.mxu0 0.0
    %198 = vmatprep.subr.mxu0 0.0
    %199 = vmatpush1.msra.mxu0 0.0
    %200 = vmatprep.subr.mxu0 0.0
    %201 = vmatpush1.msra.mxu0 0.0
    %202 = vmatprep.subr.mxu0 0.0
    %203 = vmatpush1.msra.mxu0 0.0
    %204 = vmatprep.subr.mxu0 0.0
    %205 = vmatpush1.msra.mxu0 0.0
    %206 = vmatprep.subr.mxu0 0.0
    %207 = vmatpush1.msra.mxu0 0.0
    %208 = vmatprep.subr.mxu0 0.0
    %209 = vmatpush1.msra.mxu0 0.0
    %210 = vmatprep.subr.mxu0 0.0
    %211 = vmatpush1.msra.mxu0 0.0
    %212 = vmatprep.subr.mxu0 0.0
    %213 = vmatpush1.msra.mxu0 0.0
    %214 = vmatprep.subr.mxu0 0.0
    %215 = vmatpush1.msra.mxu0 0.0
    %216 = vmatprep.subr.mxu0 0.0
    %217 = vmatpush1.msra.mxu0 0.0
    %218 = vmatprep.subr.mxu0 0.0
    %219 = vmatpush1.msra.mxu0 0.0
    %220 = vmatprep.subr.mxu0 0.0
    %221 = vmatpush1.msra.mxu0 0.0
    %222 = vmatprep.subr.mxu0 0.0
    %223 = vmatpush1.msra.mxu0 0.0
    %224 = vmatprep.subr.mxu0 0.0
    %225 = vmatpush1.msra.mxu0 0.0
    %226 = vmatprep.subr.mxu0 0.0
    %227 = vmatpush1.msra.mxu0 0.0
    %228 = vmatprep.subr.mxu0 0.0
    %229 = vmatpush1.msra.mxu0 0.0
    %230 = vmatprep.subr.mxu0 0.0
    %231 = vmatpush1.msra.mxu0 0.0
    %232 = vmatprep.subr.mxu0 0.0
    %233 = vmatpush1.msra.mxu0 0.0
    %234 = vmatprep.subr.mxu0 0.0
    %235 = vmatpush1.msra.mxu0 0.0
    %236 = vmatprep.subr.mxu0 0.0
    %237 = vmatpush1.msra.mxu0 0.0
    %238 = vmatprep.subr.mxu0 0.0
    %239 = vmatpush1.msra.mxu0 0.0
    %240 = vmatprep.subr.mxu0 0.0
    %241 = vmatpush1.msra.mxu0 0.0
    %242 = vmatprep.subr.mxu0 0.0
    %243 = vmatpush1.msra.mxu0 0.0
    %244 = vmatprep.subr.mxu0 0.0
    %245 = vmatpush1.msra.mxu0 0.0
    %246 = vmatprep.subr.mxu0 0.0
    %247 = vmatpush1.msra.mxu0 0.0
    %248 = vmatprep.subr.mxu0 0.0
    %249 = vmatpush1.msra.mxu0 0.0
    %250 = vmatprep.subr.mxu0 0.0
    %251 = vmatpush1.msra.mxu0 0.0
    %252 = vmatprep.subr.mxu0 0.0
    %253 = vmatpush1.msra.mxu0 0.0
    %254 = vmatprep.mubr.f32.mxu0 0.0
    %255 = vmatmul.mubr.f32.gmra.mrb[0].mxu0 %v185
    %v256 = vpop.f32.mrb[0].mxu0
    %v257 = vadd.f32 %v174, %v256
    %v258 = vpop.f32.mrb[0].mxu0
    %v259 = vadd.f32 %v176, %v258
    %260 = vmatprep.mubr.f32.mxu0 0.0
    %261 = vmatmul.mubr.f32.gmra.mrb[0].mxu0 %v188
    %v262 = vpop.f32.mrb[0].mxu0
    %v263 = vadd.f32 %v180, %v262
    %v264 = vpop.f32.mrb[0].mxu0
    %v265 = vadd.f32 %v182, %v264
    %266 = vdwg.mxu0
    %s267 = scalar_lea.vmem %s1, 32
    %v268 = vld [vmem:[%s267] sm:$0xff]
    %v269 = vld [vmem:[%s267 + $0x8] sm:$0xff]
    %v271 = vsel %vm100, %v268, 0
    %v274 = vsel %vm100, %v269, 0
    %276 = vmatprep.subr.mxu0 %v94
    %277 = vmatpush1.msra.mxu0 %v93
    %278 = vmatprep.subr.mxu0 0.0
    %279 = vmatpush1.msra.mxu0 0.0
    %280 = vmatprep.subr.mxu0 0.0
    %281 = vmatpush1.msra.mxu0 0.0
    %282 = vmatprep.subr.mxu0 0.0
    %283 = vmatpush1.msra.mxu0 0.0
    %284 = vmatprep.subr.mxu0 0.0
    %285 = vmatpush1.msra.mxu0 0.0
    %286 = vmatprep.subr.mxu0 0.0
    %287 = vmatpush1.msra.mxu0 0.0
    %288 = vmatprep.subr.mxu0 0.0
    %289 = vmatpush1.msra.mxu0 0.0
    %290 = vmatprep.subr.mxu0 0.0
    %291 = vmatpush1.msra.mxu0 0.0
    %292 = vmatprep.subr.mxu0 0.0
    %293 = vmatpush1.msra.mxu0 0.0
    %294 = vmatprep.subr.mxu0 0.0
    %295 = vmatpush1.msra.mxu0 0.0
    %296 = vmatprep.subr.mxu0 0.0
    %297 = vmatpush1.msra.mxu0 0.0
    %298 = vmatprep.subr.mxu0 0.0
    %299 = vmatpush1.msra.mxu0 0.0
    %300 = vmatprep.subr.mxu0 0.0
    %301 = vmatpush1.msra.mxu0 0.0
    %302 = vmatprep.subr.mxu0 0.0
    %303 = vmatpush1.msra.mxu0 0.0
    %304 = vmatprep.subr.mxu0 0.0
    %305 = vmatpush1.msra.mxu0 0.0
    %306 = vmatprep.subr.mxu0 0.0
    %307 = vmatpush1.msra.mxu0 0.0
    %308 = vmatprep.subr.mxu0 0.0
    %309 = vmatpush1.msra.mxu0 0.0
    %310 = vmatprep.subr.mxu0 0.0
    %311 = vmatpush1.msra.mxu0 0.0
    %312 = vmatprep.subr.mxu0 0.0
    %313 = vmatpush1.msra.mxu0 0.0
    %314 = vmatprep.subr.mxu0 0.0
    %315 = vmatpush1.msra.mxu0 0.0
    %316 = vmatprep.subr.mxu0 0.0
    %317 = vmatpush1.msra.mxu0 0.0
    %318 = vmatprep.subr.mxu0 0.0
    %319 = vmatpush1.msra.mxu0 0.0
    %320 = vmatprep.subr.mxu0 0.0
    %321 = vmatpush1.msra.mxu0 0.0
    %322 = vmatprep.subr.mxu0 0.0
    %323 = vmatpush1.msra.mxu0 0.0
    %324 = vmatprep.subr.mxu0 0.0
    %325 = vmatpush1.msra.mxu0 0.0
    %326 = vmatprep.subr.mxu0 0.0
    %327 = vmatpush1.msra.mxu0 0.0
    %328 = vmatprep.subr.mxu0 0.0
    %329 = vmatpush1.msra.mxu0 0.0
    %330 = vmatprep.subr.mxu0 0.0
    %331 = vmatpush1.msra.mxu0 0.0
    %332 = vmatprep.subr.mxu0 0.0
    %333 = vmatpush1.msra.mxu0 0.0
    %334 = vmatprep.subr.mxu0 0.0
    %335 = vmatpush1.msra.mxu0 0.0
    %336 = vmatprep.subr.mxu0 0.0
    %337 = vmatpush1.msra.mxu0 0.0
    %338 = vmatprep.subr.mxu0 0.0
    %339 = vmatpush1.msra.mxu0 0.0
    %340 = vmatprep.mubr.f32.mxu0 0.0
    %341 = vmatmul.mubr.f32.gmra.mrb[0].mxu0 %v271
    %v342 = vpop.f32.mrb[0].mxu0
    %v343 = vadd.f32 0.0, %v342
    %v344 = vpop.f32.mrb[0].mxu0
    %v345 = vadd.f32 0.0, %v344
    %346 = vmatprep.mubr.f32.mxu0 0.0
    %347 = vmatmul.mubr.f32.gmra.mrb[0].mxu0 %v274
    %v348 = vpop.f32.mrb[0].mxu0
    %v349 = vadd.f32 0.0, %v348
    %v350 = vpop.f32.mrb[0].mxu0
    %v351 = vadd.f32 0.0, %v350
    %352 = vdwg.mxu0
    %v353 = vadd.f32 %v257, %v343
    %v354 = vadd.f32 %v259, %v345
    %v355 = vadd.f32 %v263, %v349
    %v356 = vadd.f32 %v265, %v351
    %360 = vrot.lane.b32.xlu0 %v35, 112
    %v361 = vpop.permute.xlu0 %360
    %362 = vrot.lane.b32.xlu0 %v36, 112
    %v363 = vpop.permute.xlu0 %362
    %364 = vrot.lane.b32.xlu0 %v37, 112
    %v365 = vpop.permute.xlu0 %364
    %vm366 = vcmask 916480
    %v367 = vsel %vm366, %v361, %v363
    %v368 = vsel %vm366, %v363, %v365
    %371 = vrot.lane.b32.xlu0 %v367, 1
    %v372 = vpop.permute.xlu0 %371
    %373 = vrot.lane.b32.xlu0 %v368, 1
    %v374 = vpop.permute.xlu0 %373
    %v375 = vsel %vm73, %v372, %v374
    %v376 = vsel %vm73, %v374, %v372
    %v377 = vsel %vm78, 0.0, %v376
    %v378 = vsel %vm79, 0.0, %v375
    %379 = vrot.lane.b32.xlu0 %v367, 127
    %v380 = vpop.permute.xlu0 %379
    %381 = vrot.lane.b32.xlu0 %v368, 127
    %v382 = vpop.permute.xlu0 %381
    %v383 = vsel %vm86, %v380, %v382
    %v384 = vsel %vm86, %v382, %v380
    %v385 = vsel %vm91, 0.0, %v383
    %v386 = vsel %vm92, 0.0, %v384
    %s387 = scalar_lea.vmem %s1, 48
    %v388 = vld [vmem:[%s387] sm:$0xff]
    %v389 = vld [vmem:[%s387 + $0x8] sm:$0xff]
    %v391 = vsel %vm100, %v388, 0
    %v394 = vsel %vm100, %v389, 0
    %396 = vmatprep.subr.mxu0 %v378
    %397 = vmatpush1.msra.mxu0 %v377
    %398 = vmatprep.subr.mxu0 0.0
    %399 = vmatpush1.msra.mxu0 0.0
    %400 = vmatprep.subr.mxu0 0.0
    %401 = vmatpush1.msra.mxu0 0.0
    %402 = vmatprep.subr.mxu0 0.0
    %403 = vmatpush1.msra.mxu0 0.0
    %404 = vmatprep.subr.mxu0 0.0
    %405 = vmatpush1.msra.mxu0 0.0
    %406 = vmatprep.subr.mxu0 0.0
    %407 = vmatpush1.msra.mxu0 0.0
    %408 = vmatprep.subr.mxu0 0.0
    %409 = vmatpush1.msra.mxu0 0.0
    %410 = vmatprep.subr.mxu0 0.0
    %411 = vmatpush1.msra.mxu0 0.0
    %412 = vmatprep.subr.mxu0 0.0
    %413 = vmatpush1.msra.mxu0 0.0
    %414 = vmatprep.subr.mxu0 0.0
    %415 = vmatpush1.msra.mxu0 0.0
    %416 = vmatprep.subr.mxu0 0.0
    %417 = vmatpush1.msra.mxu0 0.0
    %418 = vmatprep.subr.mxu0 0.0
    %419 = vmatpush1.msra.mxu0 0.0
    %420 = vmatprep.subr.mxu0 0.0
    %421 = vmatpush1.msra.mxu0 0.0
    %422 = vmatprep.subr.mxu0 0.0
    %423 = vmatpush1.msra.mxu0 0.0
    %424 = vmatprep.subr.mxu0 0.0
    %425 = vmatpush1.msra.mxu0 0.0
    %426 = vmatprep.subr.mxu0 0.0
    %427 = vmatpush1.msra.mxu0 0.0
    %428 = vmatprep.subr.mxu0 0.0
    %429 = vmatpush1.msra.mxu0 0.0
    %430 = vmatprep.subr.mxu0 0.0
    %431 = vmatpush1.msra.mxu0 0.0
    %432 = vmatprep.subr.mxu0 0.0
    %433 = vmatpush1.msra.mxu0 0.0
    %434 = vmatprep.subr.mxu0 0.0
    %435 = vmatpush1.msra.mxu0 0.0
    %436 = vmatprep.subr.mxu0 0.0
    %437 = vmatpush1.msra.mxu0 0.0
    %438 = vmatprep.subr.mxu0 0.0
    %439 = vmatpush1.msra.mxu0 0.0
    %440 = vmatprep.subr.mxu0 0.0
    %441 = vmatpush1.msra.mxu0 0.0
    %442 = vmatprep.subr.mxu0 0.0
    %443 = vmatpush1.msra.mxu0 0.0
    %444 = vmatprep.subr.mxu0 0.0
    %445 = vmatpush1.msra.mxu0 0.0
    %446 = vmatprep.subr.mxu0 0.0
    %447 = vmatpush1.msra.mxu0 0.0
    %448 = vmatprep.subr.mxu0 0.0
    %449 = vmatpush1.msra.mxu0 0.0
    %450 = vmatprep.subr.mxu0 0.0
    %451 = vmatpush1.msra.mxu0 0.0
    %452 = vmatprep.subr.mxu0 0.0
    %453 = vmatpush1.msra.mxu0 0.0
    %454 = vmatprep.subr.mxu0 0.0
    %455 = vmatpush1.msra.mxu0 0.0
    %456 = vmatprep.subr.mxu0 0.0
    %457 = vmatpush1.msra.mxu0 0.0
    %458 = vmatprep.subr.mxu0 0.0
    %459 = vmatpush1.msra.mxu0 0.0
    %460 = vmatprep.mubr.f32.mxu0 0.0
    %461 = vmatmul.mubr.f32.gmra.mrb[0].mxu0 %v391
    %v462 = vpop.f32.mrb[0].mxu0
    %v463 = vadd.f32 0.0, %v462
    %v464 = vpop.f32.mrb[0].mxu0
    %v465 = vadd.f32 0.0, %v464
    %466 = vmatprep.mubr.f32.mxu0 0.0
    %467 = vmatmul.mubr.f32.gmra.mrb[0].mxu0 %v394
    %v468 = vpop.f32.mrb[0].mxu0
    %v469 = vadd.f32 0.0, %v468
    %v470 = vpop.f32.mrb[0].mxu0
    %v471 = vadd.f32 0.0, %v470
    %472 = vdwg.mxu0
    %v473 = vadd.f32 %v353, %v463
    %v474 = vadd.f32 %v354, %v465
    %v475 = vadd.f32 %v355, %v469
    %v476 = vadd.f32 %v356, %v471
    %s477 = scalar_lea.vmem %s1, 64
    %v478 = vld [vmem:[%s477] sm:$0xff]
    %v479 = vld [vmem:[%s477 + $0x8] sm:$0xff]
    %v481 = vsel %vm100, %v478, 0
    %v484 = vsel %vm100, %v479, 0
    %486 = vmatprep.subr.mxu0 %v368
    %487 = vmatpush1.msra.mxu0 %v367
    %488 = vmatprep.subr.mxu0 0.0
    %489 = vmatpush1.msra.mxu0 0.0
    %490 = vmatprep.subr.mxu0 0.0
    %491 = vmatpush1.msra.mxu0 0.0
    %492 = vmatprep.subr.mxu0 0.0
    %493 = vmatpush1.msra.mxu0 0.0
    %494 = vmatprep.subr.mxu0 0.0
    %495 = vmatpush1.msra.mxu0 0.0
    %496 = vmatprep.subr.mxu0 0.0
    %497 = vmatpush1.msra.mxu0 0.0
    %498 = vmatprep.subr.mxu0 0.0
    %499 = vmatpush1.msra.mxu0 0.0
    %500 = vmatprep.subr.mxu0 0.0
    %501 = vmatpush1.msra.mxu0 0.0
    %502 = vmatprep.subr.mxu0 0.0
    %503 = vmatpush1.msra.mxu0 0.0
    %504 = vmatprep.subr.mxu0 0.0
    %505 = vmatpush1.msra.mxu0 0.0
    %506 = vmatprep.subr.mxu0 0.0
    %507 = vmatpush1.msra.mxu0 0.0
    %508 = vmatprep.subr.mxu0 0.0
    %509 = vmatpush1.msra.mxu0 0.0
    %510 = vmatprep.subr.mxu0 0.0
    %511 = vmatpush1.msra.mxu0 0.0
    %512 = vmatprep.subr.mxu0 0.0
    %513 = vmatpush1.msra.mxu0 0.0
    %514 = vmatprep.subr.mxu0 0.0
    %515 = vmatpush1.msra.mxu0 0.0
    %516 = vmatprep.subr.mxu0 0.0
    %517 = vmatpush1.msra.mxu0 0.0
    %518 = vmatprep.subr.mxu0 0.0
    %519 = vmatpush1.msra.mxu0 0.0
    %520 = vmatprep.subr.mxu0 0.0
    %521 = vmatpush1.msra.mxu0 0.0
    %522 = vmatprep.subr.mxu0 0.0
    %523 = vmatpush1.msra.mxu0 0.0
    %524 = vmatprep.subr.mxu0 0.0
    %525 = vmatpush1.msra.mxu0 0.0
    %526 = vmatprep.subr.mxu0 0.0
    %527 = vmatpush1.msra.mxu0 0.0
    %528 = vmatprep.subr.mxu0 0.0
    %529 = vmatpush1.msra.mxu0 0.0
    %530 = vmatprep.subr.mxu0 0.0
    %531 = vmatpush1.msra.mxu0 0.0
    %532 = vmatprep.subr.mxu0 0.0
    %533 = vmatpush1.msra.mxu0 0.0
    %534 = vmatprep.subr.mxu0 0.0
    %535 = vmatpush1.msra.mxu0 0.0
    %536 = vmatprep.subr.mxu0 0.0
    %537 = vmatpush1.msra.mxu0 0.0
    %538 = vmatprep.subr.mxu0 0.0
    %539 = vmatpush1.msra.mxu0 0.0
    %540 = vmatprep.subr.mxu0 0.0
    %541 = vmatpush1.msra.mxu0 0.0
    %542 = vmatprep.subr.mxu0 0.0
    %543 = vmatpush1.msra.mxu0 0.0
    %544 = vmatprep.subr.mxu0 0.0
    %545 = vmatpush1.msra.mxu0 0.0
    %546 = vmatprep.subr.mxu0 0.0
    %547 = vmatpush1.msra.mxu0 0.0
    %548 = vmatprep.subr.mxu0 0.0
    %549 = vmatpush1.msra.mxu0 0.0
    %550 = vmatprep.mubr.f32.mxu0 0.0
    %551 = vmatmul.mubr.f32.gmra.mrb[0].mxu0 %v481
    %v552 = vpop.f32.mrb[0].mxu0
    %v553 = vadd.f32 0.0, %v552
    %v554 = vpop.f32.mrb[0].mxu0
    %v555 = vadd.f32 0.0, %v554
    %556 = vmatprep.mubr.f32.mxu0 0.0
    %557 = vmatmul.mubr.f32.gmra.mrb[0].mxu0 %v484
    %v558 = vpop.f32.mrb[0].mxu0
    %v559 = vadd.f32 0.0, %v558
    %v560 = vpop.f32.mrb[0].mxu0
    %v561 = vadd.f32 0.0, %v560
    %562 = vdwg.mxu0
    %v563 = vadd.f32 %v473, %v553
    %v564 = vadd.f32 %v474, %v555
    %v565 = vadd.f32 %v475, %v559
    %v566 = vadd.f32 %v476, %v561
    %s567 = scalar_lea.vmem %s1, 80
    %v568 = vld [vmem:[%s567] sm:$0xff]
    %v569 = vld [vmem:[%s567 + $0x8] sm:$0xff]
    %v571 = vsel %vm100, %v568, 0
    %v574 = vsel %vm100, %v569, 0
    %576 = vmatprep.subr.mxu0 %v386
    %577 = vmatpush1.msra.mxu0 %v385
    %578 = vmatprep.subr.mxu0 0.0
    %579 = vmatpush1.msra.mxu0 0.0
    %580 = vmatprep.subr.mxu0 0.0
    %581 = vmatpush1.msra.mxu0 0.0
    %582 = vmatprep.subr.mxu0 0.0
    %583 = vmatpush1.msra.mxu0 0.0
    %584 = vmatprep.subr.mxu0 0.0
    %585 = vmatpush1.msra.mxu0 0.0
    %586 = vmatprep.subr.mxu0 0.0
    %587 = vmatpush1.msra.mxu0 0.0
    %588 = vmatprep.subr.mxu0 0.0
    %589 = vmatpush1.msra.mxu0 0.0
    %590 = vmatprep.subr.mxu0 0.0
    %591 = vmatpush1.msra.mxu0 0.0
    %592 = vmatprep.subr.mxu0 0.0
    %593 = vmatpush1.msra.mxu0 0.0
    %594 = vmatprep.subr.mxu0 0.0
    %595 = vmatpush1.msra.mxu0 0.0
    %596 = vmatprep.subr.mxu0 0.0
    %597 = vmatpush1.msra.mxu0 0.0
    %598 = vmatprep.subr.mxu0 0.0
    %599 = vmatpush1.msra.mxu0 0.0
    %600 = vmatprep.subr.mxu0 0.0
    %601 = vmatpush1.msra.mxu0 0.0
    %602 = vmatprep.subr.mxu0 0.0
    %603 = vmatpush1.msra.mxu0 0.0
    %604 = vmatprep.subr.mxu0 0.0
    %605 = vmatpush1.msra.mxu0 0.0
    %606 = vmatprep.subr.mxu0 0.0
    %607 = vmatpush1.msra.mxu0 0.0
    %608 = vmatprep.subr.mxu0 0.0
    %609 = vmatpush1.msra.mxu0 0.0
    %610 = vmatprep.subr.mxu0 0.0
    %611 = vmatpush1.msra.mxu0 0.0
    %612 = vmatprep.subr.mxu0 0.0
    %613 = vmatpush1.msra.mxu0 0.0
    %614 = vmatprep.subr.mxu0 0.0
    %615 = vmatpush1.msra.mxu0 0.0
    %616 = vmatprep.subr.mxu0 0.0
    %617 = vmatpush1.msra.mxu0 0.0
    %618 = vmatprep.subr.mxu0 0.0
    %619 = vmatpush1.msra.mxu0 0.0
    %620 = vmatprep.subr.mxu0 0.0
    %621 = vmatpush1.msra.mxu0 0.0
    %622 = vmatprep.subr.mxu0 0.0
    %623 = vmatpush1.msra.mxu0 0.0
    %624 = vmatprep.subr.mxu0 0.0
    %625 = vmatpush1.msra.mxu0 0.0
    %626 = vmatprep.subr.mxu0 0.0
    %627 = vmatpush1.msra.mxu0 0.0
    %628 = vmatprep.subr.mxu0 0.0
    %629 = vmatpush1.msra.mxu0 0.0
    %630 = vmatprep.subr.mxu0 0.0
    %631 = vmatpush1.msra.mxu0 0.0
    %632 = vmatprep.subr.mxu0 0.0
    %633 = vmatpush1.msra.mxu0 0.0
    %634 = vmatprep.subr.mxu0 0.0
    %635 = vmatpush1.msra.mxu0 0.0
    %636 = vmatprep.subr.mxu0 0.0
    %637 = vmatpush1.msra.mxu0 0.0
    %638 = vmatprep.subr.mxu0 0.0
    %639 = vmatpush1.msra.mxu0 0.0
    %640 = vmatprep.mubr.f32.mxu0 0.0
    %641 = vmatmul.mubr.f32.gmra.mrb[0].mxu0 %v571
    %v642 = vpop.f32.mrb[0].mxu0
    %v643 = vadd.f32 0.0, %v642
    %v644 = vpop.f32.mrb[0].mxu0
    %v645 = vadd.f32 0.0, %v644
    %646 = vmatprep.mubr.f32.mxu0 0.0
    %647 = vmatmul.mubr.f32.gmra.mrb[0].mxu0 %v574
    %v648 = vpop.f32.mrb[0].mxu0
    %v649 = vadd.f32 0.0, %v648
    %v650 = vpop.f32.mrb[0].mxu0
    %v651 = vadd.f32 0.0, %v650
    %652 = vdwg.mxu0
    %v653 = vadd.f32 %v563, %v643
    %v654 = vadd.f32 %v564, %v645
    %v655 = vadd.f32 %v565, %v649
    %v656 = vadd.f32 %v566, %v651
    %657 = vrot.lane.b32.xlu0 %v35, 96
    %v658 = vpop.permute.xlu0 %657
    %659 = vrot.lane.b32.xlu0 %v36, 96
    %v660 = vpop.permute.xlu0 %659
    %661 = vrot.lane.b32.xlu0 %v37, 96
    %v662 = vpop.permute.xlu0 %661
    %vm663 = vcmask 785408
    %v664 = vsel %vm663, %v658, %v660
    %v665 = vsel %vm663, %v660, %v662
    %668 = vrot.lane.b32.xlu0 %v664, 1
    %v669 = vpop.permute.xlu0 %668
    %670 = vrot.lane.b32.xlu0 %v665, 1
    %v671 = vpop.permute.xlu0 %670
    %v672 = vsel %vm73, %v669, %v671
    %v673 = vsel %vm73, %v671, %v669
    %v674 = vsel %vm78, 0.0, %v673
    %v675 = vsel %vm79, 0.0, %v672
    %676 = vrot.lane.b32.xlu0 %v664, 127
    %v677 = vpop.permute.xlu0 %676
    %678 = vrot.lane.b32.xlu0 %v665, 127
    %v679 = vpop.permute.xlu0 %678
    %v680 = vsel %vm86, %v677, %v679
    %v681 = vsel %vm86, %v679, %v677
    %v682 = vsel %vm91, 0.0, %v680
    %v683 = vsel %vm92, 0.0, %v681
    %s684 = scalar_lea.vmem %s1, 96
    %v685 = vld [vmem:[%s684] sm:$0xff]
    %v686 = vld [vmem:[%s684 + $0x8] sm:$0xff]
    %v688 = vsel %vm100, %v685, 0
    %v691 = vsel %vm100, %v686, 0
    %693 = vmatprep.subr.mxu0 %v675
    %694 = vmatpush1.msra.mxu0 %v674
    %695 = vmatprep.subr.mxu0 0.0
    %696 = vmatpush1.msra.mxu0 0.0
    %697 = vmatprep.subr.mxu0 0.0
    %698 = vmatpush1.msra.mxu0 0.0
    %699 = vmatprep.subr.mxu0 0.0
    %700 = vmatpush1.msra.mxu0 0.0
    %701 = vmatprep.subr.mxu0 0.0
    %702 = vmatpush1.msra.mxu0 0.0
    %703 = vmatprep.subr.mxu0 0.0
    %704 = vmatpush1.msra.mxu0 0.0
    %705 = vmatprep.subr.mxu0 0.0
    %706 = vmatpush1.msra.mxu0 0.0
    %707 = vmatprep.subr.mxu0 0.0
    %708 = vmatpush1.msra.mxu0 0.0
    %709 = vmatprep.subr.mxu0 0.0
    %710 = vmatpush1.msra.mxu0 0.0
    %711 = vmatprep.subr.mxu0 0.0
    %712 = vmatpush1.msra.mxu0 0.0
    %713 = vmatprep.subr.mxu0 0.0
    %714 = vmatpush1.msra.mxu0 0.0
    %715 = vmatprep.subr.mxu0 0.0
    %716 = vmatpush1.msra.mxu0 0.0
    %717 = vmatprep.subr.mxu0 0.0
    %718 = vmatpush1.msra.mxu0 0.0
    %719 = vmatprep.subr.mxu0 0.0
    %720 = vmatpush1.msra.mxu0 0.0
    %721 = vmatprep.subr.mxu0 0.0
    %722 = vmatpush1.msra.mxu0 0.0
    %723 = vmatprep.subr.mxu0 0.0
    %724 = vmatpush1.msra.mxu0 0.0
    %725 = vmatprep.subr.mxu0 0.0
    %726 = vmatpush1.msra.mxu0 0.0
    %727 = vmatprep.subr.mxu0 0.0
    %728 = vmatpush1.msra.mxu0 0.0
    %729 = vmatprep.subr.mxu0 0.0
    %730 = vmatpush1.msra.mxu0 0.0
    %731 = vmatprep.subr.mxu0 0.0
    %732 = vmatpush1.msra.mxu0 0.0
    %733 = vmatprep.subr.mxu0 0.0
    %734 = vmatpush1.msra.mxu0 0.0
    %735 = vmatprep.subr.mxu0 0.0
    %736 = vmatpush1.msra.mxu0 0.0
    %737 = vmatprep.subr.mxu0 0.0
    %738 = vmatpush1.msra.mxu0 0.0
    %739 = vmatprep.subr.mxu0 0.0
    %740 = vmatpush1.msra.mxu0 0.0
    %741 = vmatprep.subr.mxu0 0.0
    %742 = vmatpush1.msra.mxu0 0.0
    %743 = vmatprep.subr.mxu0 0.0
    %744 = vmatpush1.msra.mxu0 0.0
    %745 = vmatprep.subr.mxu0 0.0
    %746 = vmatpush1.msra.mxu0 0.0
    %747 = vmatprep.subr.mxu0 0.0
    %748 = vmatpush1.msra.mxu0 0.0
    %749 = vmatprep.subr.mxu0 0.0
    %750 = vmatpush1.msra.mxu0 0.0
    %751 = vmatprep.subr.mxu0 0.0
    %752 = vmatpush1.msra.mxu0 0.0
    %753 = vmatprep.subr.mxu0 0.0
    %754 = vmatpush1.msra.mxu0 0.0
    %755 = vmatprep.subr.mxu0 0.0
    %756 = vmatpush1.msra.mxu0 0.0
    %757 = vmatprep.mubr.f32.mxu0 0.0
    %758 = vmatmul.mubr.f32.gmra.mrb[0].mxu0 %v688
    %v759 = vpop.f32.mrb[0].mxu0
    %v760 = vadd.f32 0.0, %v759
    %v761 = vpop.f32.mrb[0].mxu0
    %v762 = vadd.f32 0.0, %v761
    %763 = vmatprep.mubr.f32.mxu0 0.0
    %764 = vmatmul.mubr.f32.gmra.mrb[0].mxu0 %v691
    %v765 = vpop.f32.mrb[0].mxu0
    %v766 = vadd.f32 0.0, %v765
    %v767 = vpop.f32.mrb[0].mxu0
    %v768 = vadd.f32 0.0, %v767
    %769 = vdwg.mxu0
    %v770 = vadd.f32 %v653, %v760
    %v771 = vadd.f32 %v654, %v762
    %v772 = vadd.f32 %v655, %v766
    %v773 = vadd.f32 %v656, %v768
    %s774 = scalar_lea.vmem %s1, 112
    %v775 = vld [vmem:[%s774] sm:$0xff]
    %v776 = vld [vmem:[%s774 + $0x8] sm:$0xff]
    %v778 = vsel %vm100, %v775, 0
    %v781 = vsel %vm100, %v776, 0
    %783 = vmatprep.subr.mxu0 %v665
    %784 = vmatpush1.msra.mxu0 %v664
    %785 = vmatprep.subr.mxu0 0.0
    %786 = vmatpush1.msra.mxu0 0.0
    %787 = vmatprep.subr.mxu0 0.0
    %788 = vmatpush1.msra.mxu0 0.0
    %789 = vmatprep.subr.mxu0 0.0
    %790 = vmatpush1.msra.mxu0 0.0
    %791 = vmatprep.subr.mxu0 0.0
    %792 = vmatpush1.msra.mxu0 0.0
    %793 = vmatprep.subr.mxu0 0.0
    %794 = vmatpush1.msra.mxu0 0.0
    %795 = vmatprep.subr.mxu0 0.0
    %796 = vmatpush1.msra.mxu0 0.0
    %797 = vmatprep.subr.mxu0 0.0
    %798 = vmatpush1.msra.mxu0 0.0
    %799 = vmatprep.subr.mxu0 0.0
    %800 = vmatpush1.msra.mxu0 0.0
    %801 = vmatprep.subr.mxu0 0.0
    %802 = vmatpush1.msra.mxu0 0.0
    %803 = vmatprep.subr.mxu0 0.0
    %804 = vmatpush1.msra.mxu0 0.0
    %805 = vmatprep.subr.mxu0 0.0
    %806 = vmatpush1.msra.mxu0 0.0
    %807 = vmatprep.subr.mxu0 0.0
    %808 = vmatpush1.msra.mxu0 0.0
    %809 = vmatprep.subr.mxu0 0.0
    %810 = vmatpush1.msra.mxu0 0.0
    %811 = vmatprep.subr.mxu0 0.0
    %812 = vmatpush1.msra.mxu0 0.0
    %813 = vmatprep.subr.mxu0 0.0
    %814 = vmatpush1.msra.mxu0 0.0
    %815 = vmatprep.subr.mxu0 0.0
    %816 = vmatpush1.msra.mxu0 0.0
    %817 = vmatprep.subr.mxu0 0.0
    %818 = vmatpush1.msra.mxu0 0.0
    %819 = vmatprep.subr.mxu0 0.0
    %820 = vmatpush1.msra.mxu0 0.0
    %821 = vmatprep.subr.mxu0 0.0
    %822 = vmatpush1.msra.mxu0 0.0
    %823 = vmatprep.subr.mxu0 0.0
    %824 = vmatpush1.msra.mxu0 0.0
    %825 = vmatprep.subr.mxu0 0.0
    %826 = vmatpush1.msra.mxu0 0.0
    %827 = vmatprep.subr.mxu0 0.0
    %828 = vmatpush1.msra.mxu0 0.0
    %829 = vmatprep.subr.mxu0 0.0
    %830 = vmatpush1.msra.mxu0 0.0
    %831 = vmatprep.subr.mxu0 0.0
    %832 = vmatpush1.msra.mxu0 0.0
    %833 = vmatprep.subr.mxu0 0.0
    %834 = vmatpush1.msra.mxu0 0.0
    %835 = vmatprep.subr.mxu0 0.0
    %836 = vmatpush1.msra.mxu0 0.0
    %837 = vmatprep.subr.mxu0 0.0
    %838 = vmatpush1.msra.mxu0 0.0
    %839 = vmatprep.subr.mxu0 0.0
    %840 = vmatpush1.msra.mxu0 0.0
    %841 = vmatprep.subr.mxu0 0.0
    %842 = vmatpush1.msra.mxu0 0.0
    %843 = vmatprep.subr.mxu0 0.0
    %844 = vmatpush1.msra.mxu0 0.0
    %845 = vmatprep.subr.mxu0 0.0
    %846 = vmatpush1.msra.mxu0 0.0
    %847 = vmatprep.mubr.f32.mxu0 0.0
    %848 = vmatmul.mubr.f32.gmra.mrb[0].mxu0 %v778
    %v849 = vpop.f32.mrb[0].mxu0
    %v850 = vadd.f32 0.0, %v849
    %v851 = vpop.f32.mrb[0].mxu0
    %v852 = vadd.f32 0.0, %v851
    %853 = vmatprep.mubr.f32.mxu0 0.0
    %854 = vmatmul.mubr.f32.gmra.mrb[0].mxu0 %v781
    %v855 = vpop.f32.mrb[0].mxu0
    %v856 = vadd.f32 0.0, %v855
    %v857 = vpop.f32.mrb[0].mxu0
    %v858 = vadd.f32 0.0, %v857
    %859 = vdwg.mxu0
    %v860 = vadd.f32 %v770, %v850
    %v861 = vadd.f32 %v771, %v852
    %v862 = vadd.f32 %v772, %v856
    %v863 = vadd.f32 %v773, %v858
    %s864 = scalar_lea.vmem %s1, 128
    %v865 = vld [vmem:[%s864] sm:$0xff]
    %v866 = vld [vmem:[%s864 + $0x8] sm:$0xff]
    %v868 = vsel %vm100, %v865, 0
    %v871 = vsel %vm100, %v866, 0
    %873 = vmatprep.subr.mxu0 %v683
    %874 = vmatpush1.msra.mxu0 %v682
    %875 = vmatprep.subr.mxu0 0.0
    %876 = vmatpush1.msra.mxu0 0.0
    %877 = vmatprep.subr.mxu0 0.0
    %878 = vmatpush1.msra.mxu0 0.0
    %879 = vmatprep.subr.mxu0 0.0
    %880 = vmatpush1.msra.mxu0 0.0
    %881 = vmatprep.subr.mxu0 0.0
    %882 = vmatpush1.msra.mxu0 0.0
    %883 = vmatprep.subr.mxu0 0.0
    %884 = vmatpush1.msra.mxu0 0.0
    %885 = vmatprep.subr.mxu0 0.0
    %886 = vmatpush1.msra.mxu0 0.0
    %887 = vmatprep.subr.mxu0 0.0
    %888 = vmatpush1.msra.mxu0 0.0
    %889 = vmatprep.subr.mxu0 0.0
    %890 = vmatpush1.msra.mxu0 0.0
    %891 = vmatprep.subr.mxu0 0.0
    %892 = vmatpush1.msra.mxu0 0.0
    %893 = vmatprep.subr.mxu0 0.0
    %894 = vmatpush1.msra.mxu0 0.0
    %895 = vmatprep.subr.mxu0 0.0
    %896 = vmatpush1.msra.mxu0 0.0
    %897 = vmatprep.subr.mxu0 0.0
    %898 = vmatpush1.msra.mxu0 0.0
    %899 = vmatprep.subr.mxu0 0.0
    %900 = vmatpush1.msra.mxu0 0.0
    %901 = vmatprep.subr.mxu0 0.0
    %902 = vmatpush1.msra.mxu0 0.0
    %903 = vmatprep.subr.mxu0 0.0
    %904 = vmatpush1.msra.mxu0 0.0
    %905 = vmatprep.subr.mxu0 0.0
    %906 = vmatpush1.msra.mxu0 0.0
    %907 = vmatprep.subr.mxu0 0.0
    %908 = vmatpush1.msra.mxu0 0.0
    %909 = vmatprep.subr.mxu0 0.0
    %910 = vmatpush1.msra.mxu0 0.0
    %911 = vmatprep.subr.mxu0 0.0
    %912 = vmatpush1.msra.mxu0 0.0
    %913 = vmatprep.subr.mxu0 0.0
    %914 = vmatpush1.msra.mxu0 0.0
    %915 = vmatprep.subr.mxu0 0.0
    %916 = vmatpush1.msra.mxu0 0.0
    %917 = vmatprep.subr.mxu0 0.0
    %918 = vmatpush1.msra.mxu0 0.0
    %919 = vmatprep.subr.mxu0 0.0
    %920 = vmatpush1.msra.mxu0 0.0
    %921 = vmatprep.subr.mxu0 0.0
    %922 = vmatpush1.msra.mxu0 0.0
    %923 = vmatprep.subr.mxu0 0.0
    %924 = vmatpush1.msra.mxu0 0.0
    %925 = vmatprep.subr.mxu0 0.0
    %926 = vmatpush1.msra.mxu0 0.0
    %927 = vmatprep.subr.mxu0 0.0
    %928 = vmatpush1.msra.mxu0 0.0
    %929 = vmatprep.subr.mxu0 0.0
    %930 = vmatpush1.msra.mxu0 0.0
    %931 = vmatprep.subr.mxu0 0.0
    %932 = vmatpush1.msra.mxu0 0.0
    %933 = vmatprep.subr.mxu0 0.0
    %934 = vmatpush1.msra.mxu0 0.0
    %935 = vmatprep.subr.mxu0 0.0
    %936 = vmatpush1.msra.mxu0 0.0
    %937 = vmatprep.mubr.f32.mxu0 0.0
    %938 = vmatmul.mubr.f32.gmra.mrb[0].mxu0 %v868
    %v939 = vpop.f32.mrb[0].mxu0
    %v940 = vadd.f32 0.0, %v939
    %v941 = vpop.f32.mrb[0].mxu0
    %v942 = vadd.f32 0.0, %v941
    %943 = vmatprep.mubr.f32.mxu0 0.0
    %944 = vmatmul.mubr.f32.gmra.mrb[0].mxu0 %v871
    %v945 = vpop.f32.mrb[0].mxu0
    %v946 = vadd.f32 0.0, %v945
    %v947 = vpop.f32.mrb[0].mxu0
    %v948 = vadd.f32 0.0, %v947
    %949 = vdwg.mxu0
    %v950 = vadd.f32 %v860, %v940
    %v951 = vadd.f32 %v861, %v942
    %v952 = vadd.f32 %v862, %v946
    %v953 = vadd.f32 %v863, %v948
    %v954 = vld [vmem:[%s2] sm:$0xff]
    %v955 = vld [vmem:[%s2 + $0x8] sm:$0xff]
    %957 = vset.pattern.permute.xlu0 0
    %958 = vperm.xlu0 %957, %v954
    %v959 = vpop.permute.xlu0 %958
    %962 = vset.pattern.permute.xlu0 0
    %963 = vperm.xlu0 %962, %v955
    %v964 = vpop.permute.xlu0 %963
    %v966 = vadd.f32 %v950, %v959
    %v967 = vadd.f32 %v951, %v959
    %v968 = vadd.f32 %v952, %v964
    %v969 = vadd.f32 %v953, %v964
    %v970 = vmax.f32 %v966, 0.0
    %v971 = vmax.f32 %v967, 0.0
    %v972 = vmax.f32 %v968, 0.0
    %v973 = vmax.f32 %v969, 0.0
    %v974 = vpack.c.bf16 %v972, %v970
    %v975 = vpack.c.bf16 %v973, %v971
    %v976 = vld [vmem:[#allocation2] sm:$0xff]
    %v977 = vld [vmem:[#allocation2 + $0x8] sm:$0xff]
    %v978 = vld [vmem:[#allocation2 + $0x10] sm:$0xff]
    %v979 = vld [vmem:[#allocation2 + $0x18] sm:$0xff]
    %v980 = vld [vmem:[#allocation2 + $0x20] sm:$0xff]
    %v981 = vld [vmem:[#allocation2 + $0x28] sm:$0xff]
    %v982 = vld [vmem:[#allocation2 + $0x30] sm:$0xff]
    %v983 = vld [vmem:[#allocation2 + $0x38] sm:$0xff]
    %v984 = vld [vmem:[#allocation2 + $0x40] sm:$0xff]
    %v985 = vld [vmem:[#allocation2 + $0x48] sm:$0xff]
    %v986 = vld [vmem:[#allocation2 + $0x50] sm:$0xff]
    %v987 = vld [vmem:[#allocation2 + $0x58] sm:$0xff]
    %v988 = vld [vmem:[#allocation2 + $0x60] sm:$0xff]
    %v989 = vld [vmem:[#allocation2 + $0x68] sm:$0xff]
    %v990 = vld [vmem:[#allocation2 + $0x70] sm:$0xff]
    %v991 = vld [vmem:[#allocation2 + $0x78] sm:$0xff]
    %v992 = vld [vmem:[#allocation2 + $0x80] sm:$0xff]
    %v993 = vld [vmem:[#allocation2 + $0x88] sm:$0xff]
    %v994 = vld [vmem:[#allocation2 + $0x90] sm:$0xff]
    %v995 = vld [vmem:[#allocation2 + $0x98] sm:$0xff]
    %v996 = vld [vmem:[#allocation2 + $0xa0] sm:$0xff]
    %v997 = vld [vmem:[#allocation2 + $0xa8] sm:$0xff]
    %v998 = vld [vmem:[#allocation2 + $0xb0] sm:$0xff]
    %v999 = vld [vmem:[#allocation2 + $0xb8] sm:$0xff]
    %v1000 = vld [vmem:[#allocation2 + $0xc0] sm:$0xff]
    %v1001 = vld [vmem:[#allocation2 + $0xc8] sm:$0xff]
    %v1002 = vld [vmem:[#allocation2 + $0xd0] sm:$0xff]
    %v1003 = vld [vmem:[#allocation2 + $0xd8] sm:$0xff]
    %v1004 = vld [vmem:[#allocation2 + $0xe0] sm:$0xff]
    %v1005 = vld [vmem:[#allocation2 + $0xe8] sm:$0xff]
    %v1006 = vld [vmem:[#allocation2 + $0xf0] sm:$0xff]
    %v1007 = vld [vmem:[#allocation2 + $0xf8] sm:$0xff]
    %v1008 = vld [vmem:[%s4] sm:$0x3]
    %v1010 = vlaneseq
    %v1011 = vshrl.u32 %v1010, 7
    %v1012 = vsub.s32 0, %v1011
    %v1013 = vrot.slane %v1008, %v1012
    %v1014 = vlaneseq
    %v1015 = vshrl.u32 %v1014, 7
    %v1016 = vsub.s32 1, %v1015
    %v1017 = vrot.slane %v1008, %v1016
    %v1052 = vunpack.c.l.b16 %v976
    %v1053 = vunpack.c.h.b16 %v976
    %v1054 = vunpack.c.l.b16 %v977
    %v1055 = vunpack.c.h.b16 %v977
    %v1056 = vunpack.c.l.b16 %v978
    %v1057 = vunpack.c.h.b16 %v978
    %v1058 = vunpack.c.l.b16 %v979
    %v1059 = vunpack.c.h.b16 %v979
    %v1060 = vunpack.c.l.b16 %v980
    %v1061 = vunpack.c.h.b16 %v980
    %v1062 = vunpack.c.l.b16 %v981
    %v1063 = vunpack.c.h.b16 %v981
    %v1064 = vunpack.c.l.b16 %v982
    %v1065 = vunpack.c.h.b16 %v982
    %v1066 = vunpack.c.l.b16 %v983
    %v1067 = vunpack.c.h.b16 %v983
    %v1068 = vunpack.c.l.b16 %v984
    %v1069 = vunpack.c.h.b16 %v984
    %v1070 = vunpack.c.l.b16 %v985
    %v1071 = vunpack.c.h.b16 %v985
    %v1072 = vunpack.c.l.b16 %v986
    %v1073 = vunpack.c.h.b16 %v986
    %v1074 = vunpack.c.l.b16 %v987
    %v1075 = vunpack.c.h.b16 %v987
    %v1076 = vunpack.c.l.b16 %v988
    %v1077 = vunpack.c.h.b16 %v988
    %v1078 = vunpack.c.l.b16 %v989
    %v1079 = vunpack.c.h.b16 %v989
    %v1080 = vunpack.c.l.b16 %v990
    %v1081 = vunpack.c.h.b16 %v990
    %v1082 = vunpack.c.l.b16 %v991
    %v1083 = vunpack.c.h.b16 %v991
    %v1084 = vunpack.c.l.b16 %v992
    %v1085 = vunpack.c.h.b16 %v992
    %v1086 = vunpack.c.l.b16 %v993
    %v1087 = vunpack.c.h.b16 %v993
    %v1088 = vunpack.c.l.b16 %v994
    %v1089 = vunpack.c.h.b16 %v994
    %v1090 = vunpack.c.l.b16 %v995
    %v1091 = vunpack.c.h.b16 %v995
    %v1092 = vunpack.c.l.b16 %v996
    %v1093 = vunpack.c.h.b16 %v996
    %v1094 = vunpack.c.l.b16 %v997
    %v1095 = vunpack.c.h.b16 %v997
    %v1096 = vunpack.c.l.b16 %v998
    %v1097 = vunpack.c.h.b16 %v998
    %v1098 = vunpack.c.l.b16 %v999
    %v1099 = vunpack.c.h.b16 %v999
    %v1100 = vunpack.c.l.b16 %v1000
    %v1101 = vunpack.c.h.b16 %v1000
    %v1102 = vunpack.c.l.b16 %v1001
    %v1103 = vunpack.c.h.b16 %v1001
    %v1104 = vunpack.c.l.b16 %v1002
    %v1105 = vunpack.c.h.b16 %v1002
    %v1106 = vunpack.c.l.b16 %v1003
    %v1107 = vunpack.c.h.b16 %v1003
    %v1108 = vunpack.c.l.b16 %v1004
    %v1109 = vunpack.c.h.b16 %v1004
    %v1110 = vunpack.c.l.b16 %v1005
    %v1111 = vunpack.c.h.b16 %v1005
    %v1112 = vunpack.c.l.b16 %v1006
    %v1113 = vunpack.c.h.b16 %v1006
    %v1114 = vunpack.c.l.b16 %v1007
    %v1115 = vunpack.c.h.b16 %v1007
    %v1116 = vpack.c.b16 %v1054, %v1052
    %v1117 = vpack.c.b16 %v1055, %v1053
    %v1118 = vpack.c.b16 %v1058, %v1056
    %v1119 = vpack.c.b16 %v1059, %v1057
    %v1120 = vpack.c.b16 %v1062, %v1060
    %v1121 = vpack.c.b16 %v1063, %v1061
    %v1122 = vpack.c.b16 %v1066, %v1064
    %v1123 = vpack.c.b16 %v1067, %v1065
    %v1124 = vpack.c.b16 %v1070, %v1068
    %v1125 = vpack.c.b16 %v1071, %v1069
    %v1126 = vpack.c.b16 %v1074, %v1072
    %v1127 = vpack.c.b16 %v1075, %v1073
    %v1128 = vpack.c.b16 %v1078, %v1076
    %v1129 = vpack.c.b16 %v1079, %v1077
    %v1130 = vpack.c.b16 %v1082, %v1080
    %v1131 = vpack.c.b16 %v1083, %v1081
    %v1132 = vpack.c.b16 %v1086, %v1084
    %v1133 = vpack.c.b16 %v1087, %v1085
    %v1134 = vpack.c.b16 %v1090, %v1088
    %v1135 = vpack.c.b16 %v1091, %v1089
    %v1136 = vpack.c.b16 %v1094, %v1092
    %v1137 = vpack.c.b16 %v1095, %v1093
    %v1138 = vpack.c.b16 %v1098, %v1096
    %v1139 = vpack.c.b16 %v1099, %v1097
    %v1140 = vpack.c.b16 %v1102, %v1100
    %v1141 = vpack.c.b16 %v1103, %v1101
    %v1142 = vpack.c.b16 %v1106, %v1104
    %v1143 = vpack.c.b16 %v1107, %v1105
    %v1144 = vpack.c.b16 %v1110, %v1108
    %v1145 = vpack.c.b16 %v1111, %v1109
    %v1146 = vpack.c.b16 %v1114, %v1112
    %v1147 = vpack.c.b16 %v1115, %v1113
    %1180 = vmatprep.subr.bf16.mxu0 %v1117
    %1181 = vmatpush1.bf16.msra.mxu0 %v1116
    %1182 = vmatprep.subr.bf16.mxu0 %v1119
    %1183 = vmatpush1.bf16.msra.mxu0 %v1118
    %1184 = vmatprep.subr.bf16.mxu0 %v1121
    %1185 = vmatpush1.bf16.msra.mxu0 %v1120
    %1186 = vmatprep.subr.bf16.mxu0 %v1123
    %1187 = vmatpush1.bf16.msra.mxu0 %v1122
    %1188 = vmatprep.subr.bf16.mxu0 %v1125
    %1189 = vmatpush1.bf16.msra.mxu0 %v1124
    %1190 = vmatprep.subr.bf16.mxu0 %v1127
    %1191 = vmatpush1.bf16.msra.mxu0 %v1126
    %1192 = vmatprep.subr.bf16.mxu0 %v1129
    %1193 = vmatpush1.bf16.msra.mxu0 %v1128
    %1194 = vmatprep.subr.bf16.mxu0 %v1131
    %1195 = vmatpush1.bf16.msra.mxu0 %v1130
    %1196 = vmatprep.subr.bf16.mxu0 %v1133
    %1197 = vmatpush1.bf16.msra.mxu0 %v1132
    %1198 = vmatprep.subr.bf16.mxu0 %v1135
    %1199 = vmatpush1.bf16.msra.mxu0 %v1134
    %1200 = vmatprep.subr.bf16.mxu0 %v1137
    %1201 = vmatpush1.bf16.msra.mxu0 %v1136
    %1202 = vmatprep.subr.bf16.mxu0 %v1139
    %1203 = vmatpush1.bf16.msra.mxu0 %v1138
    %1204 = vmatprep.subr.bf16.mxu0 %v1141
    %1205 = vmatpush1.bf16.msra.mxu0 %v1140
    %1206 = vmatprep.subr.bf16.mxu0 %v1143
    %1207 = vmatpush1.bf16.msra.mxu0 %v1142
    %1208 = vmatprep.subr.bf16.mxu0 %v1145
    %1209 = vmatpush1.bf16.msra.mxu0 %v1144
    %1210 = vmatprep.subr.bf16.mxu0 %v1147
    %1211 = vmatpush1.bf16.msra.mxu0 %v1146
    %1212 = vmatprep.mubr.bf16.mxu0 %v975
    %1213 = vmatmul.mubr.bf16.gmra.mrb[0].mxu0 %v974
    %v1214 = vpop.f32.mrb[0].mxu0
    %v1215 = vadd.f32 %v1013, %v1214
    %v1216 = vpop.f32.mrb[0].mxu0
    %v1217 = vadd.f32 %v1017, %v1216
    %v1218 = vpop.f32.mrb[0].mxu0
    %v1219 = vadd.f32 %v1013, %v1218
    %v1220 = vpop.f32.mrb[0].mxu0
    %v1221 = vadd.f32 %v1017, %v1220
    %1222 = vdwg.mxu0
    %v1223 = vxor.u32 %v1215, 2147483648
    %v1224 = vxor.u32 %v1217, 2147483648
    %v1225 = vxor.u32 %v1219, 2147483648
    %v1226 = vxor.u32 %v1221, 2147483648
    %v1227 = vmul.f32 %v1223, 1.442695
    %v1228 = vpow.pop %v1227
    %v1229 = vmul.f32 %v1224, 1.442695
    %v1230 = vpow.pop %v1229
    %v1231 = vmul.f32 %v1225, 1.442695
    %v1232 = vpow.pop %v1231
    %v1233 = vmul.f32 %v1226, 1.442695
    %v1234 = vpow.pop %v1233
    %v1235 = vadd.f32 %v1228, 1.0
    %v1236 = vadd.f32 %v1230, 1.0
    %v1237 = vadd.f32 %v1232, 1.0
    %v1238 = vadd.f32 %v1234, 1.0
    %v1239 = vrcp.pop %v1235
    %v1240 = vmul.f32 1.0, %v1239
    %v1241 = vrcp.pop %v1236
    %v1242 = vmul.f32 1.0, %v1241
    %v1243 = vrcp.pop %v1237
    %v1244 = vmul.f32 1.0, %v1243
    %v1245 = vrcp.pop %v1238
    %v1246 = vmul.f32 1.0, %v1245
    %v1247 = vmul.f32 %v970, %v1240
    %v1248 = vmul.f32 %v971, %v1242
    %v1249 = vmul.f32 %v972, %v1244
    %v1250 = vmul.f32 %v973, %v1246
    %v1251 = vrot.slane %v1247, 4
    %v1252 = vadd.f32 %v1247, %v1251
    %v1253 = vrot.slane %v1252, 2
    %v1254 = vadd.f32 %v1252, %v1253
    %v1255 = vrot.slane %v1254, 1
    %v1256 = vadd.f32 %v1254, %v1255
    %v1257 = vrot.slane %v1248, 4
    %v1258 = vadd.f32 %v1248, %v1257
    %v1259 = vrot.slane %v1258, 2
    %v1260 = vadd.f32 %v1258, %v1259
    %v1261 = vrot.slane %v1260, 1
    %v1262 = vadd.f32 %v1260, %v1261
    %v1263 = vrot.slane %v1249, 4
    %v1264 = vadd.f32 %v1249, %v1263
    %v1265 = vrot.slane %v1264, 2
    %v1266 = vadd.f32 %v1264, %v1265
    %v1267 = vrot.slane %v1266, 1
    %v1268 = vadd.f32 %v1266, %v1267
    %v1269 = vrot.slane %v1250, 4
    %v1270 = vadd.f32 %v1250, %v1269
    %v1271 = vrot.slane %v1270, 2
    %v1272 = vadd.f32 %v1270, %v1271
    %v1273 = vrot.slane %v1272, 1
    %v1274 = vadd.f32 %v1272, %v1273
    %v1279 = vcombine.low %v1256, %v1262
    %v1281 = vunpack.c.l.s4 1983009808
    %v1282 = vunpack.c.0.s8 %v1281
    %v1283 = vlaneseq
    %v1284 = vshrl.u32 %v1283, 7
    %v1285 = vsub.s32 %v1282, %v1284
    %v1286 = vrot.slane %v1279, %v1285
    %v1287 = vcombine.low %v1268, %v1274
    %v1289 = vunpack.c.l.s4 1983009808
    %v1290 = vunpack.c.0.s8 %v1289
    %v1291 = vlaneseq
    %v1292 = vshrl.u32 %v1291, 7
    %v1293 = vsub.s32 %v1290, %v1292
    %v1294 = vrot.slane %v1287, %v1293
    %vm1295 = vcmask 1044484
    %v1296 = vsel %vm1295, %v1286, %v1286
    %vm1297 = vcmask 1046534
    %v1298 = vsel %vm1297, %v1286, %v1296
    %v1299 = vrot.slane %v1294, 7
    %vm1300 = vcmask 1041409
    %v1301 = vsel %vm1300, %v1299, %v1298
    %vm1302 = vcmask 1043459
    %v1303 = vsel %vm1302, %v1299, %v1301
    %vm1304 = vcmask 1045509
    %v1305 = vsel %vm1304, %v1299, %v1303
    %vm1306 = vcmask 1047559
    %v1307 = vsel %vm1306, %v1299, %v1305
    %1309 = vst [vmem:[#allocation5] sm:$0xf] %v1307
    // Predicated region
    $region26: #{tpu_custom_call.1} parent=1 // pred_check
      _
    $region27: #{tpu_custom_call.1} parent=1 // pred_check_branch
      %1311 = sbr.rel (0) target = $region29
    $region28: #{tpu_custom_call.1} parent=1 // pred_region
      %s1313 = ssub.s32 64, 64
      %1314 = vsyncadd [#allocation4], %s1313
      %s1316 = sshll.u32 [#allocation5], 4
      %s1317 = int_to_ptr.vmem [resolvable:$true] %s1316
      %1319 = dma.vmem_to_hbm [thread:$0]  %s1317, 64, %s5, [#allocation4]
    $region29: #{tpu_custom_call.1} parent=1 // pred_fallthru
      _
    // Predicated region
    $region30: #{tpu_custom_call.1} parent=1 // pred_check
      _
    $region31: #{tpu_custom_call.1} parent=1 // pred_check_branch
      %1321 = sbr.rel (0) target = $region33
    $region32: #{tpu_custom_call.1} parent=1 // pred_region
      %1322 = dma.done [#allocation4], 64
    $region33: #{tpu_custom_call.1} parent=1 // pred_fallthru
      _
    %1323 = vsyncpa [#allocation3], 1
    %1324 = vsyncpa [#allocation4], 1

</llo_original>
